<compile_context>
chip_gen: v6e
topology: v6e:2x2x1
jax: 0.10.0
libtpu: 0.0.40
codegen_flags: <defaults>
</compile_context>

<pallas_src>
import functools

import jax
import jax.numpy as jnp
from jax.experimental import pallas as pl
from jax.experimental.pallas import tpu as pltpu

EPS = 1e-5  # torch.nn.LayerNorm default eps


def _pick_tile(total, target, mult):
    """Largest tile <= target that divides `total` and is a multiple of `mult`
    (falls back to the full extent, which is always legal for a BlockSpec)."""
    if total <= target:
        return total
    d = (target // mult) * mult
    while d >= mult:
        if total % d == 0:
            return d
        d -= mult
    return total


# ---------------- Kernel A: LayerNorm(z) + fused (a | a-gate | g) projection ----------------
# One wide matmul zn @ [Wa | Wag | Wg]; writes `a` channels-first (for the triangle matmul)
# and the sigmoid output gate `g` row-major, both as bf16.
def _rows_kernel(z_ref, gz_ref, bz_ref, w_ref, b_ref, a_ref, g_ref, *, c_dim):
    z = z_ref[...].astype(jnp.float32)                                   # (TR, Z)
    mu = jnp.mean(z, axis=-1, keepdims=True)
    var = jnp.mean(jnp.square(z - mu), axis=-1, keepdims=True)
    zn = (z - mu) * jax.lax.rsqrt(var + EPS) * gz_ref[...] + bz_ref[...]

    h = jnp.dot(zn, w_ref[...], preferred_element_type=jnp.float32) + b_ref[...]  # (TR, 2C+Z)
    a = h[:, :c_dim] * jax.nn.sigmoid(h[:, c_dim:2 * c_dim])             # (TR, C)
    a_ref[...] = a.T.astype(a_ref.dtype)                                 # (C, TR) channels-first
    g_ref[...] = jax.nn.sigmoid(h[:, 2 * c_dim:]).astype(g_ref.dtype)    # (TR, Z)


# ------------- Kernel B: triangle contraction o[c,i,j] = sum_l a[c,i,l] * a[c,j,l] ----------
# Channels-first batched MXU matmul, tiled over (channel, i, j, l); l is a reduction axis
# accumulated in an f32 VMEM scratch (P3 init/finalize pattern).
def _tri_kernel(ai_ref, aj_ref, o_ref, acc_ref):
    @pl.when(pl.program_id(3) == 0)
    def _():
        acc_ref[...] = jnp.zeros_like(acc_ref)

    acc_ref[...] += jnp.einsum('cil,cjl->cij', ai_ref[...], aj_ref[...],
                               preferred_element_type=jnp.float32)       # (TC, TI, TJ) f32 acc

    @pl.when(pl.program_id(3) == pl.num_programs(3) - 1)
    def _():
        o_ref[...] = acc_ref[...].astype(o_ref.dtype)


# ---------- Kernel C: LayerNorm over c + output projection + gating (channels-last) ---------
# Reads `o` channels-first and transposes the block to rows in VMEM (no XLA glue transpose).
def _out_kernel(o_ref, gc_ref, bc_ref, wo_ref, bo_ref, g_ref, out_ref):
    o = o_ref[...].astype(jnp.float32).T                                 # (TR, C)
    mu = jnp.mean(o, axis=-1, keepdims=True)
    var = jnp.mean(jnp.square(o - mu), axis=-1, keepdims=True)
    on = (o - mu) * jax.lax.rsqrt(var + EPS) * gc_ref[...] + bc_ref[...]
    proj = jnp.dot(on, wo_ref[...], preferred_element_type=jnp.float32) + bo_ref[...]
    out_ref[...] = (proj * g_ref[...].astype(jnp.float32)).astype(out_ref.dtype)


def tri_out_forward(z, params, *, tile_rows=1024, tile_i=256, tile_j=256,
                    tile_l=512, tile_c=8):
    L, L2, Z = z.shape
    assert L == L2
    C = params['Wa'].shape[1]
    N = L * L

    tr = _pick_tile(N, tile_rows, 128)   # row tile for A/C (lane dim of the channels-first views)
    ti = _pick_tile(L, tile_i, 8)        # i tile of the contraction (sublane dim of its output)
    tj = _pick_tile(L, tile_j, 128)      # j tile of the contraction (lane dim of its output)
    tl = _pick_tile(L, tile_l, 128)      # l (reduction) tile of the contraction
    tc = _pick_tile(C, tile_c, 1)        # channel (batch) tile of the contraction

    row = lambda v: v.reshape(1, -1)
    z2 = z.reshape(N, Z)

    # Single concatenated projection weight/bias for kernel A: [Wa | Wag | Wg], [ba | bag | bg].
    w_cat = jnp.concatenate([params['Wa'], params['Wag'], params['Wg']], axis=1)   # (Z, 2C+Z)
    b_cat = jnp.concatenate([params['ba'], params['bag'], params['bg']]).reshape(1, -1)
    K = 2 * C + Z

    # --- Kernel A: LN + fused projections; `a` comes out channels-first, bf16 ---
    a_cf, g2 = pl.pallas_call(
        functools.partial(_rows_kernel, c_dim=C),
        out_shape=(jax.ShapeDtypeStruct((C, N), jnp.bfloat16),
                   jax.ShapeDtypeStruct((N, Z), jnp.bfloat16)),
        grid=(N // tr,),
        in_specs=[
            pl.BlockSpec((tr, Z), lambda i: (i, 0)),
            pl.BlockSpec((1, Z), lambda i: (0, 0)),
            pl.BlockSpec((1, Z), lambda i: (0, 0)),
            pl.BlockSpec((Z, K), lambda i: (0, 0)),
            pl.BlockSpec((1, K), lambda i: (0, 0)),
        ],
        out_specs=(pl.BlockSpec((C, tr), lambda i: (0, i)),
                   pl.BlockSpec((tr, Z), lambda i: (i, 0))),
        compiler_params=pltpu.CompilerParams(dimension_semantics=("parallel",)),
    )(z2, row(params['gz']), row(params['bz']), w_cat, b_cat)

    a3 = a_cf.reshape(C, L, L)           # layout-preserving reshape (free)

    # --- Kernel B: per-channel L x L triangle contraction on the MXU (bf16 in, f32 acc) ---
    o_cf = pl.pallas_call(
        _tri_kernel,
        out_shape=jax.ShapeDtypeStruct((C, L, L), jnp.bfloat16),
        grid=(C // tc, L // ti, L // tj, L // tl),
        in_specs=[pl.BlockSpec((tc, ti, tl), lambda c, i, j, l: (c, i, l)),
                  pl.BlockSpec((tc, tj, tl), lambda c, i, j, l: (c, j, l))],
        out_specs=pl.BlockSpec((tc, ti, tj), lambda c, i, j, l: (c, i, j)),
        scratch_shapes=[pltpu.VMEM((tc, ti, tj), jnp.float32)],
        compiler_params=pltpu.CompilerParams(
            dimension_semantics=("parallel", "parallel", "parallel", "arbitrary"),
            vmem_limit_bytes=64 * 1024 * 1024),
    )(a3, a3)

    # --- Kernel C: LN over c + output projection + output gate, channels-last rows ---
    out2 = pl.pallas_call(
        _out_kernel,
        out_shape=jax.ShapeDtypeStruct((N, Z), z.dtype),
        grid=(N // tr,),
        in_specs=[
            pl.BlockSpec((C, tr), lambda i: (0, i)),
            pl.BlockSpec((1, C), lambda i: (0, 0)),
            pl.BlockSpec((1, C), lambda i: (0, 0)),
            pl.BlockSpec((C, Z), lambda i: (0, 0)),
            pl.BlockSpec((1, Z), lambda i: (0, 0)),
            pl.BlockSpec((tr, Z), lambda i: (i, 0)),
        ],
        out_specs=pl.BlockSpec((tr, Z), lambda i: (i, 0)),
        compiler_params=pltpu.CompilerParams(dimension_semantics=("parallel",)),
    )(o_cf.reshape(C, N), row(params['gc']), row(params['bc']),
      params['Wo'], row(params['bo']), g2)

    return out2.reshape(L, L, Z)


# ---------------- Pure-JAX f32 reference (mirrors the PyTorch forward exactly) ----------------
def tri_out_reference(z, p):
    def ln(x, g, b):
        mu = jnp.mean(x, axis=-1, keepdims=True)
        var = jnp.mean(jnp.square(x - mu), axis=-1, keepdims=True)
        return (x - mu) * jax.lax.rsqrt(var + EPS) * g + b

    zn = ln(z, p['gz'], p['bz'])
    a = (zn @ p['Wa'] + p['ba']) * jax.nn.sigmoid(zn @ p['Wag'] + p['bag'])
    b = a  # PyTorch code re-uses alinear/aglinear for b
    o = jnp.einsum('ilc,jlc->ijc', a, b)
    o = ln(o, p['gc'], p['bc'])
    o = o @ p['Wo'] + p['bo']
    return o * jax.nn.sigmoid(zn @ p['Wg'] + p['bg'])


if __name__ == "__main__":
    L, Z, C = 16, 32, 16  # seq len, z_dim, c

    key = jax.random.PRNGKey(0)
    kz, *ks = jax.random.split(key, 12)
    z = jax.random.normal(kz, (L, L, Z), dtype=jnp.float32)

    params = dict(
        gz=jnp.ones((Z,), jnp.float32) + 0.1 * jax.random.normal(ks[0], (Z,)),
        bz=0.1 * jax.random.normal(ks[1], (Z,)),
        gc=jnp.ones((C,), jnp.float32) + 0.1 * jax.random.normal(ks[2], (C,)),
        bc=0.1 * jax.random.normal(ks[3], (C,)),
        Wa=0.2 * jax.random.normal(ks[4], (Z, C)),
        ba=0.1 * jax.random.normal(ks[5], (C,)),
        Wag=0.2 * jax.random.normal(ks[6], (Z, C)),
        bag=0.1 * jax.random.normal(ks[7], (C,)),
        Wg=0.2 * jax.random.normal(ks[8], (Z, Z)),
        bg=0.1 * jax.random.normal(ks[9], (Z,)),
        Wo=0.2 * jax.random.normal(ks[10], (C, Z)),
        bo=jnp.zeros((Z,), jnp.float32),
    )
    # blinear / bglinear from __init__ are unused in forward(); omitted intentionally.

    out = jax.block_until_ready(tri_out_forward(z, params))
    ref = tri_out_reference(z, params)
    assert out.shape == (L, L, Z)
    max_err = float(jnp.max(jnp.abs(out - ref)))
    # bf16 intermediates (a, g, o) -> tolerance loosened vs the all-f32 version.
    assert jnp.allclose(out, ref, atol=5e-2, rtol=5e-2), f"mismatch vs reference (max|err|={max_err})"
    print("KERNEL_OK")
</pallas_src>

<mosaic_0001>
module attributes {stable_mosaic.version = 11 : i64} {
  func.func @_rows_kernel(%arg0: i32, %arg1: memref<256x32xf32, #tpu.memory_space<vmem>>, %arg2: memref<1x32xf32, #tpu.memory_space<vmem>>, %arg3: memref<1x32xf32, #tpu.memory_space<vmem>>, %arg4: memref<32x64xf32, #tpu.memory_space<vmem>>, %arg5: memref<1x64xf32, #tpu.memory_space<vmem>>, %arg6: memref<16x256xbf16, #tpu.memory_space<vmem>>, %arg7: memref<256x32xbf16, #tpu.memory_space<vmem>>) attributes {dimension_semantics = [#tpu.dimension_semantics<parallel>], iteration_bounds = array<i64: 1>, scalar_prefetch = 0 : i64, scratch_operands = 0 : i64, tpu.core_type = #tpu.core_type<tc>, window_params = [{transform_indices = @transform_0, window_bounds = array<i64: 256, 32>}, {pipeline_mode = #tpu.pipeline_mode<synchronous>, transform_indices = @transform_1, window_bounds = array<i64: 1, 32>}, {pipeline_mode = #tpu.pipeline_mode<synchronous>, transform_indices = @transform_2, window_bounds = array<i64: 1, 32>}, {pipeline_mode = #tpu.pipeline_mode<synchronous>, transform_indices = @transform_3, window_bounds = array<i64: 32, 64>}, {pipeline_mode = #tpu.pipeline_mode<synchronous>, transform_indices = @transform_4, window_bounds = array<i64: 1, 64>}, {transform_indices = @transform_5, window_bounds = array<i64: 16, 256>}, {transform_indices = @transform_6, window_bounds = array<i64: 256, 32>}]} {
    %c0 = arith.constant 0 : index
    %c0_0 = arith.constant 0 : index
    %0 = vector.load %arg1[%c0, %c0_0] : memref<256x32xf32, #tpu.memory_space<vmem>>, vector<256x32xf32>
    %cst = arith.constant dense<0.000000e+00> : vector<256xf32>
    %1 = vector.multi_reduction <add>, %0, %cst [1] : vector<256x32xf32> to vector<256xf32>
    %2 = vector.shape_cast %1 : vector<256xf32> to vector<256x1xf32>
    %cst_1 = arith.constant 3.200000e+01 : f32
    %3 = vector.broadcast %cst_1 : f32 to vector<256x1xf32>
    %4 = arith.divf %2, %3 : vector<256x1xf32>
    %5 = vector.broadcast %4 : vector<256x1xf32> to vector<256x32xf32>
    %6 = arith.subf %0, %5 : vector<256x32xf32>
    %7 = arith.mulf %6, %6 : vector<256x32xf32>
    %cst_2 = arith.constant dense<0.000000e+00> : vector<256xf32>
    %8 = vector.multi_reduction <add>, %7, %cst_2 [1] : vector<256x32xf32> to vector<256xf32>
    %9 = vector.shape_cast %8 : vector<256xf32> to vector<256x1xf32>
    %cst_3 = arith.constant 3.200000e+01 : f32
    %10 = vector.broadcast %cst_3 : f32 to vector<256x1xf32>
    %11 = arith.divf %9, %10 : vector<256x1xf32>
    %12 = vector.broadcast %4 : vector<256x1xf32> to vector<256x32xf32>
    %13 = arith.subf %0, %12 : vector<256x32xf32>
    %cst_4 = arith.constant 9.99999974E-6 : f32
    %14 = vector.broadcast %cst_4 : f32 to vector<256x1xf32>
    %15 = arith.addf %11, %14 : vector<256x1xf32>
    %16 = math.rsqrt %15 : vector<256x1xf32>
    %17 = vector.broadcast %16 : vector<256x1xf32> to vector<256x32xf32>
    %18 = arith.mulf %13, %17 : vector<256x32xf32>
    %c0_5 = arith.constant 0 : index
    %c0_6 = arith.constant 0 : index
    %19 = vector.load %arg2[%c0_5, %c0_6] : memref<1x32xf32, #tpu.memory_space<vmem>>, vector<1x32xf32>
    %20 = vector.broadcast %19 : vector<1x32xf32> to vector<256x32xf32>
    %21 = arith.mulf %18, %20 : vector<256x32xf32>
    %c0_7 = arith.constant 0 : index
    %c0_8 = arith.constant 0 : index
    %22 = vector.load %arg3[%c0_7, %c0_8] : memref<1x32xf32, #tpu.memory_space<vmem>>, vector<1x32xf32>
    %23 = vector.broadcast %22 : vector<1x32xf32> to vector<256x32xf32>
    %24 = arith.addf %21, %23 : vector<256x32xf32>
    %c0_9 = arith.constant 0 : index
    %c0_10 = arith.constant 0 : index
    %25 = vector.load %arg4[%c0_9, %c0_10] : memref<32x64xf32, #tpu.memory_space<vmem>>, vector<32x64xf32>
    %cst_11 = arith.constant dense<0.000000e+00> : vector<256x64xf32>
    %26 = tpu.matmul %24, %25, %cst_11 {dimension_numbers = #tpu.dot_dimension_numbers<[1], [0], [0], [1], [0, 0, 1, 1], [], []>} : vector<256x32xf32>, vector<32x64xf32>, vector<256x64xf32> -> vector<256x64xf32>
    %c0_12 = arith.constant 0 : index
    %c0_13 = arith.constant 0 : index
    %27 = vector.load %arg5[%c0_12, %c0_13] : memref<1x64xf32, #tpu.memory_space<vmem>>, vector<1x64xf32>
    %28 = vector.broadcast %27 : vector<1x64xf32> to vector<256x64xf32>
    %29 = arith.addf %26, %28 : vector<256x64xf32>
    %30 = vector.extract_strided_slice %29 {offsets = [0, 0], sizes = [256, 16], strides = [1, 1]} : vector<256x64xf32> to vector<256x16xf32>
    %31 = vector.extract_strided_slice %29 {offsets = [0, 16], sizes = [256, 16], strides = [1, 1]} : vector<256x64xf32> to vector<256x16xf32>
    %32 = arith.negf %31 : vector<256x16xf32>
    %33 = math.exp %32 : vector<256x16xf32>
    %cst_14 = arith.constant 1.000000e+00 : f32
    %34 = vector.broadcast %cst_14 : f32 to vector<256x16xf32>
    %35 = arith.addf %34, %33 : vector<256x16xf32>
    %36 = arith.divf %34, %35 : vector<256x16xf32>
    %37 = arith.mulf %30, %36 : vector<256x16xf32>
    %38 = tpu.transpose %37, [1, 0] : vector<256x16xf32> -> vector<16x256xf32>
    %39 = arith.truncf %38 : vector<16x256xf32> to vector<16x256xbf16>
    %c0_15 = arith.constant 0 : index
    %c0_16 = arith.constant 0 : index
    %40 = vector.load %arg6[%c0_15, %c0_16] : memref<16x256xbf16, #tpu.memory_space<vmem>>, vector<16x256xbf16>
    tpu.vector_store %arg6[%c0_15, %c0_16], %39 {strides = array<i32>} : memref<16x256xbf16, #tpu.memory_space<vmem>>, vector<16x256xbf16>,
    %41 = vector.extract_strided_slice %29 {offsets = [0, 32], sizes = [256, 32], strides = [1, 1]} : vector<256x64xf32> to vector<256x32xf32>
    %42 = arith.negf %41 : vector<256x32xf32>
    %43 = math.exp %42 : vector<256x32xf32>
    %cst_17 = arith.constant 1.000000e+00 : f32
    %44 = vector.broadcast %cst_17 : f32 to vector<256x32xf32>
    %45 = arith.addf %44, %43 : vector<256x32xf32>
    %46 = arith.divf %44, %45 : vector<256x32xf32>
    %47 = arith.truncf %46 : vector<256x32xf32> to vector<256x32xbf16>
    %c0_18 = arith.constant 0 : index
    %c0_19 = arith.constant 0 : index
    %48 = vector.load %arg7[%c0_18, %c0_19] : memref<256x32xbf16, #tpu.memory_space<vmem>>, vector<256x32xbf16>
    tpu.vector_store %arg7[%c0_18, %c0_19], %47 {strides = array<i32>} : memref<256x32xbf16, #tpu.memory_space<vmem>>, vector<256x32xbf16>,
    return
  }
  func.func @transform_0(%arg0: i32) -> (i32, i32) {
    %c0_i32 = arith.constant 0 : i32
    %c0_i32_0 = arith.constant 0 : i32
    return %arg0, %c0_i32 : i32, i32
  }
  func.func @transform_1(%arg0: i32) -> (i32, i32) {
    %c0_i32 = arith.constant 0 : i32
    %c0_i32_0 = arith.constant 0 : i32
    %c0_i32_1 = arith.constant 0 : i32
    return %c0_i32, %c0_i32_0 : i32, i32
  }
  func.func @transform_2(%arg0: i32) -> (i32, i32) {
    %c0_i32 = arith.constant 0 : i32
    %c0_i32_0 = arith.constant 0 : i32
    %c0_i32_1 = arith.constant 0 : i32
    return %c0_i32, %c0_i32_0 : i32, i32
  }
  func.func @transform_3(%arg0: i32) -> (i32, i32) {
    %c0_i32 = arith.constant 0 : i32
    %c0_i32_0 = arith.constant 0 : i32
    %c0_i32_1 = arith.constant 0 : i32
    return %c0_i32, %c0_i32_0 : i32, i32
  }
  func.func @transform_4(%arg0: i32) -> (i32, i32) {
    %c0_i32 = arith.constant 0 : i32
    %c0_i32_0 = arith.constant 0 : i32
    %c0_i32_1 = arith.constant 0 : i32
    return %c0_i32, %c0_i32_0 : i32, i32
  }
  func.func @transform_5(%arg0: i32) -> (i32, i32) {
    %c0_i32 = arith.constant 0 : i32
    %c0_i32_0 = arith.constant 0 : i32
    return %c0_i32, %arg0 : i32, i32
  }
  func.func @transform_6(%arg0: i32) -> (i32, i32) {
    %c0_i32 = arith.constant 0 : i32
    %c0_i32_0 = arith.constant 0 : i32
    return %arg0, %c0_i32 : i32, i32
  }
}

</mosaic_0001>

<llo_original>
// kernel: tpu_custom_call.1
$region0: #{tpu_custom_call.1}
  #allocation0 [shape = 'u32[]', space=smem, size = 0x4, offset = 0x4, fixed_abs, tag = 'smem constant byte address 0x4 - core index']
  #allocation1 [shape = 'u32[144,128]{1,0:T(1,128)}', space=vmem, size = 0x12000, scoped, tag = 'internal scratch']
  %s0 = inlined_call_operand.vmem [shape: f32[256,32], index: 0, kind: input, shape index: {}]
  %s1 = inlined_call_operand.vmem [shape: f32[1,32], index: 1, kind: input, shape index: {}]
  %s2 = inlined_call_operand.vmem [shape: f32[1,32], index: 2, kind: input, shape index: {}]
  %s3 = inlined_call_operand.vmem [shape: f32[32,64], index: 3, kind: input, shape index: {}]
  %s4 = inlined_call_operand.vmem [shape: f32[1,64], index: 4, kind: input, shape index: {}]
  %s5 = inlined_call_operand.hbm [shape: bf16[16,256], index: 5, kind: output, shape index: {0}]
  %s6 = inlined_call_operand.vmem [shape: bf16[256,32], index: 6, kind: output, shape index: {1}]
  %7 = xla_tuple %s5, %s6
  %s8 = sld [smem:[#allocation0]]
  $region38: #{tpu_custom_call.1} parent=0
    _
  %s10 = ssub.s32 1, %s8
  %s11 = scalar_select 0, %s10, %s8
  $region1: #{tpu_custom_call.1} parent=0
    #allocation2 [shape = 'u8[8192]{0}', space=vmem, size = 0x2000, scoped, tag = 'output window, operand 0, single buffered']
    #allocation3 [shape = 's32[1]{0}', space=sflag, size = 0x4, scoped, tag = 'scoped memory for tpu_custom_call.1']
    %12 = vsyncpa [#allocation3], 0
    // Predicated region
    $region2: #{tpu_custom_call.1} parent=1 // pred_check
      _
    $region3: #{tpu_custom_call.1} parent=1 // pred_check_branch
      %14 = sbr.rel (0) target = $region5
    $region4: #{tpu_custom_call.1} parent=1 // pred_region
      _
    $region5: #{tpu_custom_call.1} parent=1 // pred_fallthru
      _
    // Predicated region
    $region6: #{tpu_custom_call.1} parent=1 // pred_check
      _
    $region7: #{tpu_custom_call.1} parent=1 // pred_check_branch
      %16 = sbr.rel (0) target = $region9
    $region8: #{tpu_custom_call.1} parent=1 // pred_region
      _
    $region9: #{tpu_custom_call.1} parent=1 // pred_fallthru
      _
    // Predicated region
    $region10: #{tpu_custom_call.1} parent=1 // pred_check
      _
    $region11: #{tpu_custom_call.1} parent=1 // pred_check_branch
      %18 = sbr.rel (0) target = $region13
    $region12: #{tpu_custom_call.1} parent=1 // pred_region
      _
    $region13: #{tpu_custom_call.1} parent=1 // pred_fallthru
      _
    // Predicated region
    $region14: #{tpu_custom_call.1} parent=1 // pred_check
      _
    $region15: #{tpu_custom_call.1} parent=1 // pred_check_branch
      %20 = sbr.rel (0) target = $region17
    $region16: #{tpu_custom_call.1} parent=1 // pred_region
      _
    $region17: #{tpu_custom_call.1} parent=1 // pred_fallthru
      _
    // Predicated region
    $region18: #{tpu_custom_call.1} parent=1 // pred_check
      _
    $region19: #{tpu_custom_call.1} parent=1 // pred_check_branch
      %22 = sbr.rel (0) target = $region21
    $region20: #{tpu_custom_call.1} parent=1 // pred_region
      _
    $region21: #{tpu_custom_call.1} parent=1 // pred_fallthru
      _
    %v23 = vld [vmem:[%s0] sm:$0xff]
    %v24 = vld [vmem:[%s0 + $0x8] sm:$0xff]
    %v25 = vld [vmem:[%s0 + $0x10] sm:$0xff]
    %v26 = vld [vmem:[%s0 + $0x18] sm:$0xff]
    %v27 = vld [vmem:[%s0 + $0x20] sm:$0xff]
    %v28 = vld [vmem:[%s0 + $0x28] sm:$0xff]
    %v29 = vld [vmem:[%s0 + $0x30] sm:$0xff]
    %v30 = vld [vmem:[%s0 + $0x38] sm:$0xff]
    %v31 = vld [vmem:[%s0 + $0x40] sm:$0xff]
    %v32 = vld [vmem:[%s0 + $0x48] sm:$0xff]
    %v33 = vld [vmem:[%s0 + $0x50] sm:$0xff]
    %v34 = vld [vmem:[%s0 + $0x58] sm:$0xff]
    %v35 = vld [vmem:[%s0 + $0x60] sm:$0xff]
    %v36 = vld [vmem:[%s0 + $0x68] sm:$0xff]
    %v37 = vld [vmem:[%s0 + $0x70] sm:$0xff]
    %v38 = vld [vmem:[%s0 + $0x78] sm:$0xff]
    %v39 = vld [vmem:[%s0 + $0x80] sm:$0xff]
    %v40 = vld [vmem:[%s0 + $0x88] sm:$0xff]
    %v41 = vld [vmem:[%s0 + $0x90] sm:$0xff]
    %v42 = vld [vmem:[%s0 + $0x98] sm:$0xff]
    %v43 = vld [vmem:[%s0 + $0xa0] sm:$0xff]
    %v44 = vld [vmem:[%s0 + $0xa8] sm:$0xff]
    %v45 = vld [vmem:[%s0 + $0xb0] sm:$0xff]
    %v46 = vld [vmem:[%s0 + $0xb8] sm:$0xff]
    %v47 = vld [vmem:[%s0 + $0xc0] sm:$0xff]
    %v48 = vld [vmem:[%s0 + $0xc8] sm:$0xff]
    %v49 = vld [vmem:[%s0 + $0xd0] sm:$0xff]
    %v50 = vld [vmem:[%s0 + $0xd8] sm:$0xff]
    %v51 = vld [vmem:[%s0 + $0xe0] sm:$0xff]
    %v52 = vld [vmem:[%s0 + $0xe8] sm:$0xff]
    %v53 = vld [vmem:[%s0 + $0xf0] sm:$0xff]
    %v54 = vld [vmem:[%s0 + $0xf8] sm:$0xff]
    %vm55 = vcmask 261120
    %v56 = vsel %vm55, %v23, 0.0
    %57 = vadd.xlane.f32.xlu0 %v56
    %v58 = vpop.xlane.xlu0 %57
    %v59 = vsel %vm55, %v24, 0.0
    %60 = vadd.xlane.f32.xlu0 %v59
    %v61 = vpop.xlane.xlu0 %60
    %v62 = vsel %vm55, %v25, 0.0
    %63 = vadd.xlane.f32.xlu0 %v62
    %v64 = vpop.xlane.xlu0 %63
    %v65 = vsel %vm55, %v26, 0.0
    %66 = vadd.xlane.f32.xlu0 %v65
    %v67 = vpop.xlane.xlu0 %66
    %v68 = vsel %vm55, %v27, 0.0
    %69 = vadd.xlane.f32.xlu0 %v68
    %v70 = vpop.xlane.xlu0 %69
    %v71 = vsel %vm55, %v28, 0.0
    %72 = vadd.xlane.f32.xlu0 %v71
    %v73 = vpop.xlane.xlu0 %72
    %v74 = vsel %vm55, %v29, 0.0
    %75 = vadd.xlane.f32.xlu0 %v74
    %v76 = vpop.xlane.xlu0 %75
    %v77 = vsel %vm55, %v30, 0.0
    %78 = vadd.xlane.f32.xlu0 %v77
    %v79 = vpop.xlane.xlu0 %78
    %v80 = vsel %vm55, %v31, 0.0
    %81 = vadd.xlane.f32.xlu0 %v80
    %v82 = vpop.xlane.xlu0 %81
    %v83 = vsel %vm55, %v32, 0.0
    %84 = vadd.xlane.f32.xlu0 %v83
    %v85 = vpop.xlane.xlu0 %84
    %v86 = vsel %vm55, %v33, 0.0
    %87 = vadd.xlane.f32.xlu0 %v86
    %v88 = vpop.xlane.xlu0 %87
    %v89 = vsel %vm55, %v34, 0.0
    %90 = vadd.xlane.f32.xlu0 %v89
    %v91 = vpop.xlane.xlu0 %90
    %v92 = vsel %vm55, %v35, 0.0
    %93 = vadd.xlane.f32.xlu0 %v92
    %v94 = vpop.xlane.xlu0 %93
    %v95 = vsel %vm55, %v36, 0.0
    %96 = vadd.xlane.f32.xlu0 %v95
    %v97 = vpop.xlane.xlu0 %96
    %v98 = vsel %vm55, %v37, 0.0
    %99 = vadd.xlane.f32.xlu0 %v98
    %v100 = vpop.xlane.xlu0 %99
    %v101 = vsel %vm55, %v38, 0.0
    %102 = vadd.xlane.f32.xlu0 %v101
    %v103 = vpop.xlane.xlu0 %102
    %v104 = vsel %vm55, %v39, 0.0
    %105 = vadd.xlane.f32.xlu0 %v104
    %v106 = vpop.xlane.xlu0 %105
    %v107 = vsel %vm55, %v40, 0.0
    %108 = vadd.xlane.f32.xlu0 %v107
    %v109 = vpop.xlane.xlu0 %108
    %v110 = vsel %vm55, %v41, 0.0
    %111 = vadd.xlane.f32.xlu0 %v110
    %v112 = vpop.xlane.xlu0 %111
    %v113 = vsel %vm55, %v42, 0.0
    %114 = vadd.xlane.f32.xlu0 %v113
    %v115 = vpop.xlane.xlu0 %114
    %v116 = vsel %vm55, %v43, 0.0
    %117 = vadd.xlane.f32.xlu0 %v116
    %v118 = vpop.xlane.xlu0 %117
    %v119 = vsel %vm55, %v44, 0.0
    %120 = vadd.xlane.f32.xlu0 %v119
    %v121 = vpop.xlane.xlu0 %120
    %v122 = vsel %vm55, %v45, 0.0
    %123 = vadd.xlane.f32.xlu0 %v122
    %v124 = vpop.xlane.xlu0 %123
    %v125 = vsel %vm55, %v46, 0.0
    %126 = vadd.xlane.f32.xlu0 %v125
    %v127 = vpop.xlane.xlu0 %126
    %v128 = vsel %vm55, %v47, 0.0
    %129 = vadd.xlane.f32.xlu0 %v128
    %v130 = vpop.xlane.xlu0 %129
    %v131 = vsel %vm55, %v48, 0.0
    %132 = vadd.xlane.f32.xlu0 %v131
    %v133 = vpop.xlane.xlu0 %132
    %v134 = vsel %vm55, %v49, 0.0
    %135 = vadd.xlane.f32.xlu0 %v134
    %v136 = vpop.xlane.xlu0 %135
    %v137 = vsel %vm55, %v50, 0.0
    %138 = vadd.xlane.f32.xlu0 %v137
    %v139 = vpop.xlane.xlu0 %138
    %v140 = vsel %vm55, %v51, 0.0
    %141 = vadd.xlane.f32.xlu0 %v140
    %v142 = vpop.xlane.xlu0 %141
    %v143 = vsel %vm55, %v52, 0.0
    %144 = vadd.xlane.f32.xlu0 %v143
    %v145 = vpop.xlane.xlu0 %144
    %v146 = vsel %vm55, %v53, 0.0
    %147 = vadd.xlane.f32.xlu0 %v146
    %v148 = vpop.xlane.xlu0 %147
    %v149 = vsel %vm55, %v54, 0.0
    %150 = vadd.xlane.f32.xlu0 %v149
    %v151 = vpop.xlane.xlu0 %150
    %v152 = vrcp.pop 32.0
    %v153 = vmul.f32 %v58, %v152
    %v154 = vmul.f32 %v61, %v152
    %v155 = vmul.f32 %v64, %v152
    %v156 = vmul.f32 %v67, %v152
    %v157 = vmul.f32 %v70, %v152
    %v158 = vmul.f32 %v73, %v152
    %v159 = vmul.f32 %v76, %v152
    %v160 = vmul.f32 %v79, %v152
    %v161 = vmul.f32 %v82, %v152
    %v162 = vmul.f32 %v85, %v152
    %v163 = vmul.f32 %v88, %v152
    %v164 = vmul.f32 %v91, %v152
    %v165 = vmul.f32 %v94, %v152
    %v166 = vmul.f32 %v97, %v152
    %v167 = vmul.f32 %v100, %v152
    %v168 = vmul.f32 %v103, %v152
    %v169 = vmul.f32 %v106, %v152
    %v170 = vmul.f32 %v109, %v152
    %v171 = vmul.f32 %v112, %v152
    %v172 = vmul.f32 %v115, %v152
    %v173 = vmul.f32 %v118, %v152
    %v174 = vmul.f32 %v121, %v152
    %v175 = vmul.f32 %v124, %v152
    %v176 = vmul.f32 %v127, %v152
    %v177 = vmul.f32 %v130, %v152
    %v178 = vmul.f32 %v133, %v152
    %v179 = vmul.f32 %v136, %v152
    %v180 = vmul.f32 %v139, %v152
    %v181 = vmul.f32 %v142, %v152
    %v182 = vmul.f32 %v145, %v152
    %v183 = vmul.f32 %v148, %v152
    %v184 = vmul.f32 %v151, %v152
    %v185 = vsub.f32 %v23, %v153
    %v186 = vsub.f32 %v24, %v154
    %v187 = vsub.f32 %v25, %v155
    %v188 = vsub.f32 %v26, %v156
    %v189 = vsub.f32 %v27, %v157
    %v190 = vsub.f32 %v28, %v158
    %v191 = vsub.f32 %v29, %v159
    %v192 = vsub.f32 %v30, %v160
    %v193 = vsub.f32 %v31, %v161
    %v194 = vsub.f32 %v32, %v162
    %v195 = vsub.f32 %v33, %v163
    %v196 = vsub.f32 %v34, %v164
    %v197 = vsub.f32 %v35, %v165
    %v198 = vsub.f32 %v36, %v166
    %v199 = vsub.f32 %v37, %v167
    %v200 = vsub.f32 %v38, %v168
    %v201 = vsub.f32 %v39, %v169
    %v202 = vsub.f32 %v40, %v170
    %v203 = vsub.f32 %v41, %v171
    %v204 = vsub.f32 %v42, %v172
    %v205 = vsub.f32 %v43, %v173
    %v206 = vsub.f32 %v44, %v174
    %v207 = vsub.f32 %v45, %v175
    %v208 = vsub.f32 %v46, %v176
    %v209 = vsub.f32 %v47, %v177
    %v210 = vsub.f32 %v48, %v178
    %v211 = vsub.f32 %v49, %v179
    %v212 = vsub.f32 %v50, %v180
    %v213 = vsub.f32 %v51, %v181
    %v214 = vsub.f32 %v52, %v182
    %v215 = vsub.f32 %v53, %v183
    %v216 = vsub.f32 %v54, %v184
    %v217 = vmul.f32 %v185, %v185
    %v218 = vmul.f32 %v186, %v186
    %v219 = vmul.f32 %v187, %v187
    %v220 = vmul.f32 %v188, %v188
    %v221 = vmul.f32 %v189, %v189
    %v222 = vmul.f32 %v190, %v190
    %v223 = vmul.f32 %v191, %v191
    %v224 = vmul.f32 %v192, %v192
    %v225 = vmul.f32 %v193, %v193
    %v226 = vmul.f32 %v194, %v194
    %v227 = vmul.f32 %v195, %v195
    %v228 = vmul.f32 %v196, %v196
    %v229 = vmul.f32 %v197, %v197
    %v230 = vmul.f32 %v198, %v198
    %v231 = vmul.f32 %v199, %v199
    %v232 = vmul.f32 %v200, %v200
    %v233 = vmul.f32 %v201, %v201
    %v234 = vmul.f32 %v202, %v202
    %v235 = vmul.f32 %v203, %v203
    %v236 = vmul.f32 %v204, %v204
    %v237 = vmul.f32 %v205, %v205
    %v238 = vmul.f32 %v206, %v206
    %v239 = vmul.f32 %v207, %v207
    %v240 = vmul.f32 %v208, %v208
    %v241 = vmul.f32 %v209, %v209
    %v242 = vmul.f32 %v210, %v210
    %v243 = vmul.f32 %v211, %v211
    %v244 = vmul.f32 %v212, %v212
    %v245 = vmul.f32 %v213, %v213
    %v246 = vmul.f32 %v214, %v214
    %v247 = vmul.f32 %v215, %v215
    %v248 = vmul.f32 %v216, %v216
    %v249 = vsel %vm55, %v217, 0.0
    %250 = vadd.xlane.f32.xlu0 %v249
    %v251 = vpop.xlane.xlu0 %250
    %v252 = vsel %vm55, %v218, 0.0
    %253 = vadd.xlane.f32.xlu0 %v252
    %v254 = vpop.xlane.xlu0 %253
    %v255 = vsel %vm55, %v219, 0.0
    %256 = vadd.xlane.f32.xlu0 %v255
    %v257 = vpop.xlane.xlu0 %256
    %v258 = vsel %vm55, %v220, 0.0
    %259 = vadd.xlane.f32.xlu0 %v258
    %v260 = vpop.xlane.xlu0 %259
    %v261 = vsel %vm55, %v221, 0.0
    %262 = vadd.xlane.f32.xlu0 %v261
    %v263 = vpop.xlane.xlu0 %262
    %v264 = vsel %vm55, %v222, 0.0
    %265 = vadd.xlane.f32.xlu0 %v264
    %v266 = vpop.xlane.xlu0 %265
    %v267 = vsel %vm55, %v223, 0.0
    %268 = vadd.xlane.f32.xlu0 %v267
    %v269 = vpop.xlane.xlu0 %268
    %v270 = vsel %vm55, %v224, 0.0
    %271 = vadd.xlane.f32.xlu0 %v270
    %v272 = vpop.xlane.xlu0 %271
    %v273 = vsel %vm55, %v225, 0.0
    %274 = vadd.xlane.f32.xlu0 %v273
    %v275 = vpop.xlane.xlu0 %274
    %v276 = vsel %vm55, %v226, 0.0
    %277 = vadd.xlane.f32.xlu0 %v276
    %v278 = vpop.xlane.xlu0 %277
    %v279 = vsel %vm55, %v227, 0.0
    %280 = vadd.xlane.f32.xlu0 %v279
    %v281 = vpop.xlane.xlu0 %280
    %v282 = vsel %vm55, %v228, 0.0
    %283 = vadd.xlane.f32.xlu0 %v282
    %v284 = vpop.xlane.xlu0 %283
    %v285 = vsel %vm55, %v229, 0.0
    %286 = vadd.xlane.f32.xlu0 %v285
    %v287 = vpop.xlane.xlu0 %286
    %v288 = vsel %vm55, %v230, 0.0
    %289 = vadd.xlane.f32.xlu0 %v288
    %v290 = vpop.xlane.xlu0 %289
    %v291 = vsel %vm55, %v231, 0.0
    %292 = vadd.xlane.f32.xlu0 %v291
    %v293 = vpop.xlane.xlu0 %292
    %v294 = vsel %vm55, %v232, 0.0
    %295 = vadd.xlane.f32.xlu0 %v294
    %v296 = vpop.xlane.xlu0 %295
    %v297 = vsel %vm55, %v233, 0.0
    %298 = vadd.xlane.f32.xlu0 %v297
    %v299 = vpop.xlane.xlu0 %298
    %v300 = vsel %vm55, %v234, 0.0
    %301 = vadd.xlane.f32.xlu0 %v300
    %v302 = vpop.xlane.xlu0 %301
    %v303 = vsel %vm55, %v235, 0.0
    %304 = vadd.xlane.f32.xlu0 %v303
    %v305 = vpop.xlane.xlu0 %304
    %v306 = vsel %vm55, %v236, 0.0
    %307 = vadd.xlane.f32.xlu0 %v306
    %v308 = vpop.xlane.xlu0 %307
    %v309 = vsel %vm55, %v237, 0.0
    %310 = vadd.xlane.f32.xlu0 %v309
    %v311 = vpop.xlane.xlu0 %310
    %v312 = vsel %vm55, %v238, 0.0
    %313 = vadd.xlane.f32.xlu0 %v312
    %v314 = vpop.xlane.xlu0 %313
    %v315 = vsel %vm55, %v239, 0.0
    %316 = vadd.xlane.f32.xlu0 %v315
    %v317 = vpop.xlane.xlu0 %316
    %v318 = vsel %vm55, %v240, 0.0
    %319 = vadd.xlane.f32.xlu0 %v318
    %v320 = vpop.xlane.xlu0 %319
    %v321 = vsel %vm55, %v241, 0.0
    %322 = vadd.xlane.f32.xlu0 %v321
    %v323 = vpop.xlane.xlu0 %322
    %v324 = vsel %vm55, %v242, 0.0
    %325 = vadd.xlane.f32.xlu0 %v324
    %v326 = vpop.xlane.xlu0 %325
    %v327 = vsel %vm55, %v243, 0.0
    %328 = vadd.xlane.f32.xlu0 %v327
    %v329 = vpop.xlane.xlu0 %328
    %v330 = vsel %vm55, %v244, 0.0
    %331 = vadd.xlane.f32.xlu0 %v330
    %v332 = vpop.xlane.xlu0 %331
    %v333 = vsel %vm55, %v245, 0.0
    %334 = vadd.xlane.f32.xlu0 %v333
    %v335 = vpop.xlane.xlu0 %334
    %v336 = vsel %vm55, %v246, 0.0
    %337 = vadd.xlane.f32.xlu0 %v336
    %v338 = vpop.xlane.xlu0 %337
    %v339 = vsel %vm55, %v247, 0.0
    %340 = vadd.xlane.f32.xlu0 %v339
    %v341 = vpop.xlane.xlu0 %340
    %v342 = vsel %vm55, %v248, 0.0
    %343 = vadd.xlane.f32.xlu0 %v342
    %v344 = vpop.xlane.xlu0 %343
    %v345 = vmul.f32 %v251, %v152
    %v346 = vmul.f32 %v254, %v152
    %v347 = vmul.f32 %v257, %v152
    %v348 = vmul.f32 %v260, %v152
    %v349 = vmul.f32 %v263, %v152
    %v350 = vmul.f32 %v266, %v152
    %v351 = vmul.f32 %v269, %v152
    %v352 = vmul.f32 %v272, %v152
    %v353 = vmul.f32 %v275, %v152
    %v354 = vmul.f32 %v278, %v152
    %v355 = vmul.f32 %v281, %v152
    %v356 = vmul.f32 %v284, %v152
    %v357 = vmul.f32 %v287, %v152
    %v358 = vmul.f32 %v290, %v152
    %v359 = vmul.f32 %v293, %v152
    %v360 = vmul.f32 %v296, %v152
    %v361 = vmul.f32 %v299, %v152
    %v362 = vmul.f32 %v302, %v152
    %v363 = vmul.f32 %v305, %v152
    %v364 = vmul.f32 %v308, %v152
    %v365 = vmul.f32 %v311, %v152
    %v366 = vmul.f32 %v314, %v152
    %v367 = vmul.f32 %v317, %v152
    %v368 = vmul.f32 %v320, %v152
    %v369 = vmul.f32 %v323, %v152
    %v370 = vmul.f32 %v326, %v152
    %v371 = vmul.f32 %v329, %v152
    %v372 = vmul.f32 %v332, %v152
    %v373 = vmul.f32 %v335, %v152
    %v374 = vmul.f32 %v338, %v152
    %v375 = vmul.f32 %v341, %v152
    %v376 = vmul.f32 %v344, %v152
    %v377 = vadd.f32 %v345, 1e-05
    %v378 = vadd.f32 %v346, 1e-05
    %v379 = vadd.f32 %v347, 1e-05
    %v380 = vadd.f32 %v348, 1e-05
    %v381 = vadd.f32 %v349, 1e-05
    %v382 = vadd.f32 %v350, 1e-05
    %v383 = vadd.f32 %v351, 1e-05
    %v384 = vadd.f32 %v352, 1e-05
    %v385 = vadd.f32 %v353, 1e-05
    %v386 = vadd.f32 %v354, 1e-05
    %v387 = vadd.f32 %v355, 1e-05
    %v388 = vadd.f32 %v356, 1e-05
    %v389 = vadd.f32 %v357, 1e-05
    %v390 = vadd.f32 %v358, 1e-05
    %v391 = vadd.f32 %v359, 1e-05
    %v392 = vadd.f32 %v360, 1e-05
    %v393 = vadd.f32 %v361, 1e-05
    %v394 = vadd.f32 %v362, 1e-05
    %v395 = vadd.f32 %v363, 1e-05
    %v396 = vadd.f32 %v364, 1e-05
    %v397 = vadd.f32 %v365, 1e-05
    %v398 = vadd.f32 %v366, 1e-05
    %v399 = vadd.f32 %v367, 1e-05
    %v400 = vadd.f32 %v368, 1e-05
    %v401 = vadd.f32 %v369, 1e-05
    %v402 = vadd.f32 %v370, 1e-05
    %v403 = vadd.f32 %v371, 1e-05
    %v404 = vadd.f32 %v372, 1e-05
    %v405 = vadd.f32 %v373, 1e-05
    %v406 = vadd.f32 %v374, 1e-05
    %v407 = vadd.f32 %v375, 1e-05
    %v408 = vadd.f32 %v376, 1e-05
    %v409 = vrsqrt.pop %v377
    %v410 = vrsqrt.pop %v378
    %v411 = vrsqrt.pop %v379
    %v412 = vrsqrt.pop %v380
    %v413 = vrsqrt.pop %v381
    %v414 = vrsqrt.pop %v382
    %v415 = vrsqrt.pop %v383
    %v416 = vrsqrt.pop %v384
    %v417 = vrsqrt.pop %v385
    %v418 = vrsqrt.pop %v386
    %v419 = vrsqrt.pop %v387
    %v420 = vrsqrt.pop %v388
    %v421 = vrsqrt.pop %v389
    %v422 = vrsqrt.pop %v390
    %v423 = vrsqrt.pop %v391
    %v424 = vrsqrt.pop %v392
    %v425 = vrsqrt.pop %v393
    %v426 = vrsqrt.pop %v394
    %v427 = vrsqrt.pop %v395
    %v428 = vrsqrt.pop %v396
    %v429 = vrsqrt.pop %v397
    %v430 = vrsqrt.pop %v398
    %v431 = vrsqrt.pop %v399
    %v432 = vrsqrt.pop %v400
    %v433 = vrsqrt.pop %v401
    %v434 = vrsqrt.pop %v402
    %v435 = vrsqrt.pop %v403
    %v436 = vrsqrt.pop %v404
    %v437 = vrsqrt.pop %v405
    %v438 = vrsqrt.pop %v406
    %v439 = vrsqrt.pop %v407
    %v440 = vrsqrt.pop %v408
    %v441 = vmul.f32 %v185, %v409
    %v442 = vmul.f32 %v186, %v410
    %v443 = vmul.f32 %v187, %v411
    %v444 = vmul.f32 %v188, %v412
    %v445 = vmul.f32 %v189, %v413
    %v446 = vmul.f32 %v190, %v414
    %v447 = vmul.f32 %v191, %v415
    %v448 = vmul.f32 %v192, %v416
    %v449 = vmul.f32 %v193, %v417
    %v450 = vmul.f32 %v194, %v418
    %v451 = vmul.f32 %v195, %v419
    %v452 = vmul.f32 %v196, %v420
    %v453 = vmul.f32 %v197, %v421
    %v454 = vmul.f32 %v198, %v422
    %v455 = vmul.f32 %v199, %v423
    %v456 = vmul.f32 %v200, %v424
    %v457 = vmul.f32 %v201, %v425
    %v458 = vmul.f32 %v202, %v426
    %v459 = vmul.f32 %v203, %v427
    %v460 = vmul.f32 %v204, %v428
    %v461 = vmul.f32 %v205, %v429
    %v462 = vmul.f32 %v206, %v430
    %v463 = vmul.f32 %v207, %v431
    %v464 = vmul.f32 %v208, %v432
    %v465 = vmul.f32 %v209, %v433
    %v466 = vmul.f32 %v210, %v434
    %v467 = vmul.f32 %v211, %v435
    %v468 = vmul.f32 %v212, %v436
    %v469 = vmul.f32 %v213, %v437
    %v470 = vmul.f32 %v214, %v438
    %v471 = vmul.f32 %v215, %v439
    %v472 = vmul.f32 %v216, %v440
    %v473 = vld [vmem:[%s1] sm:$0x1]
    %v475 = vlaneseq
    %v476 = vshrl.u32 %v475, 7
    %v477 = vsub.s32 0, %v476
    %v478 = vrot.slane %v473, %v477
    %v480 = vmul.f32 %v441, %v478
    %v481 = vmul.f32 %v442, %v478
    %v482 = vmul.f32 %v443, %v478
    %v483 = vmul.f32 %v444, %v478
    %v484 = vmul.f32 %v445, %v478
    %v485 = vmul.f32 %v446, %v478
    %v486 = vmul.f32 %v447, %v478
    %v487 = vmul.f32 %v448, %v478
    %v488 = vmul.f32 %v449, %v478
    %v489 = vmul.f32 %v450, %v478
    %v490 = vmul.f32 %v451, %v478
    %v491 = vmul.f32 %v452, %v478
    %v492 = vmul.f32 %v453, %v478
    %v493 = vmul.f32 %v454, %v478
    %v494 = vmul.f32 %v455, %v478
    %v495 = vmul.f32 %v456, %v478
    %v496 = vmul.f32 %v457, %v478
    %v497 = vmul.f32 %v458, %v478
    %v498 = vmul.f32 %v459, %v478
    %v499 = vmul.f32 %v460, %v478
    %v500 = vmul.f32 %v461, %v478
    %v501 = vmul.f32 %v462, %v478
    %v502 = vmul.f32 %v463, %v478
    %v503 = vmul.f32 %v464, %v478
    %v504 = vmul.f32 %v465, %v478
    %v505 = vmul.f32 %v466, %v478
    %v506 = vmul.f32 %v467, %v478
    %v507 = vmul.f32 %v468, %v478
    %v508 = vmul.f32 %v469, %v478
    %v509 = vmul.f32 %v470, %v478
    %v510 = vmul.f32 %v471, %v478
    %v511 = vmul.f32 %v472, %v478
    %v512 = vld [vmem:[%s2] sm:$0x1]
    %v514 = vlaneseq
    %v515 = vshrl.u32 %v514, 7
    %v516 = vsub.s32 0, %v515
    %v517 = vrot.slane %v512, %v516
    %v519 = vadd.f32 %v480, %v517
    %v520 = vadd.f32 %v481, %v517
    %v521 = vadd.f32 %v482, %v517
    %v522 = vadd.f32 %v483, %v517
    %v523 = vadd.f32 %v484, %v517
    %v524 = vadd.f32 %v485, %v517
    %v525 = vadd.f32 %v486, %v517
    %v526 = vadd.f32 %v487, %v517
    %v527 = vadd.f32 %v488, %v517
    %v528 = vadd.f32 %v489, %v517
    %v529 = vadd.f32 %v490, %v517
    %v530 = vadd.f32 %v491, %v517
    %v531 = vadd.f32 %v492, %v517
    %v532 = vadd.f32 %v493, %v517
    %v533 = vadd.f32 %v494, %v517
    %v534 = vadd.f32 %v495, %v517
    %v535 = vadd.f32 %v496, %v517
    %v536 = vadd.f32 %v497, %v517
    %v537 = vadd.f32 %v498, %v517
    %v538 = vadd.f32 %v499, %v517
    %v539 = vadd.f32 %v500, %v517
    %v540 = vadd.f32 %v501, %v517
    %v541 = vadd.f32 %v502, %v517
    %v542 = vadd.f32 %v503, %v517
    %v543 = vadd.f32 %v504, %v517
    %v544 = vadd.f32 %v505, %v517
    %v545 = vadd.f32 %v506, %v517
    %v546 = vadd.f32 %v507, %v517
    %v547 = vadd.f32 %v508, %v517
    %v548 = vadd.f32 %v509, %v517
    %v549 = vadd.f32 %v510, %v517
    %v550 = vadd.f32 %v511, %v517
    %v551 = vld [vmem:[%s3] sm:$0xff]
    %v552 = vld [vmem:[%s3 + $0x8] sm:$0xff]
    %v553 = vld [vmem:[%s3 + $0x10] sm:$0xff]
    %v554 = vld [vmem:[%s3 + $0x18] sm:$0xff]
    %v555 = vld [vmem:[%s4] sm:$0x1]
    %v557 = vlaneseq
    %v558 = vshrl.u32 %v557, 7
    %v559 = vsub.s32 0, %v558
    %v560 = vrot.slane %v555, %v559
    %v563 = vsel %vm55, %v519, 0
    %v566 = vsel %vm55, %v520, 0
    %v569 = vsel %vm55, %v521, 0
    %v572 = vsel %vm55, %v522, 0
    %v575 = vsel %vm55, %v523, 0
    %v578 = vsel %vm55, %v524, 0
    %v581 = vsel %vm55, %v525, 0
    %v584 = vsel %vm55, %v526, 0
    %v587 = vsel %vm55, %v527, 0
    %v590 = vsel %vm55, %v528, 0
    %v593 = vsel %vm55, %v529, 0
    %v596 = vsel %vm55, %v530, 0
    %v599 = vsel %vm55, %v531, 0
    %v602 = vsel %vm55, %v532, 0
    %v605 = vsel %vm55, %v533, 0
    %v608 = vsel %vm55, %v534, 0
    %v611 = vsel %vm55, %v535, 0
    %v614 = vsel %vm55, %v536, 0
    %v617 = vsel %vm55, %v537, 0
    %v620 = vsel %vm55, %v538, 0
    %v623 = vsel %vm55, %v539, 0
    %v626 = vsel %vm55, %v540, 0
    %v629 = vsel %vm55, %v541, 0
    %v632 = vsel %vm55, %v542, 0
    %v635 = vsel %vm55, %v543, 0
    %v638 = vsel %vm55, %v544, 0
    %v641 = vsel %vm55, %v545, 0
    %v644 = vsel %vm55, %v546, 0
    %v647 = vsel %vm55, %v547, 0
    %v650 = vsel %vm55, %v548, 0
    %v653 = vsel %vm55, %v549, 0
    %v656 = vsel %vm55, %v550, 0
    %658 = vmatprep.subr.mxu0 0.0
    %659 = vmatpush1.msra.mxu0 0.0
    %660 = vmatprep.subr.mxu0 0.0
    %661 = vmatpush1.msra.mxu0 0.0
    %662 = vmatprep.subr.mxu0 0.0
    %663 = vmatpush1.msra.mxu0 0.0
    %664 = vmatprep.subr.mxu0 0.0
    %665 = vmatpush1.msra.mxu0 0.0
    %666 = vmatprep.subr.mxu0 0.0
    %667 = vmatpush1.msra.mxu0 0.0
    %668 = vmatprep.subr.mxu0 0.0
    %669 = vmatpush1.msra.mxu0 0.0
    %670 = vmatprep.subr.mxu0 0.0
    %671 = vmatpush1.msra.mxu0 0.0
    %672 = vmatprep.subr.mxu0 0.0
    %673 = vmatpush1.msra.mxu0 0.0
    %674 = vmatprep.subr.mxu0 0.0
    %675 = vmatpush1.msra.mxu0 0.0
    %676 = vmatprep.subr.mxu0 0.0
    %677 = vmatpush1.msra.mxu0 0.0
    %678 = vmatprep.subr.mxu0 0.0
    %679 = vmatpush1.msra.mxu0 0.0
    %680 = vmatprep.subr.mxu0 0.0
    %681 = vmatpush1.msra.mxu0 0.0
    %682 = vmatprep.subr.mxu0 0.0
    %683 = vmatpush1.msra.mxu0 %v554
    %684 = vmatprep.subr.mxu0 0.0
    %685 = vmatpush1.msra.mxu0 %v553
    %686 = vmatprep.subr.mxu0 0.0
    %687 = vmatpush1.msra.mxu0 %v552
    %688 = vmatprep.subr.mxu0 0.0
    %689 = vmatpush1.msra.mxu0 %v551
    %690 = vmatprep.subr.mxu0 0.0
    %691 = vmatpush2.msra.mxu0 0.0
    %692 = vmatprep.subr.mxu0 0.0
    %693 = vmatpush2.msra.mxu0 0.0
    %694 = vmatprep.subr.mxu0 0.0
    %695 = vmatpush2.msra.mxu0 0.0
    %696 = vmatprep.subr.mxu0 0.0
    %697 = vmatpush2.msra.mxu0 0.0
    %698 = vmatprep.subr.mxu0 0.0
    %699 = vmatpush2.msra.mxu0 0.0
    %700 = vmatprep.subr.mxu0 0.0
    %701 = vmatpush2.msra.mxu0 0.0
    %702 = vmatprep.subr.mxu0 0.0
    %703 = vmatpush2.msra.mxu0 0.0
    %704 = vmatprep.subr.mxu0 0.0
    %705 = vmatpush2.msra.mxu0 0.0
    %706 = vmatprep.subr.mxu0 0.0
    %707 = vmatpush2.msra.mxu0 0.0
    %708 = vmatprep.subr.mxu0 0.0
    %709 = vmatpush2.msra.mxu0 0.0
    %710 = vmatprep.subr.mxu0 0.0
    %711 = vmatpush2.msra.mxu0 0.0
    %712 = vmatprep.subr.mxu0 0.0
    %713 = vmatpush2.msra.mxu0 0.0
    %714 = vmatprep.subr.mxu0 0.0
    %715 = vmatpush2.msra.mxu0 0.0
    %716 = vmatprep.subr.mxu0 0.0
    %717 = vmatpush2.msra.mxu0 0.0
    %718 = vmatprep.subr.mxu0 0.0
    %719 = vmatpush2.msra.mxu0 0.0
    %720 = vmatprep.subr.mxu0 0.0
    %721 = vmatpush2.msra.mxu0 0.0
    %722 = vmatprep.mubr.f32.mxu0 0.0
    %723 = vmatmul.mubr.f32.gmra.mxu0 %v563
    %v724 = vpop.f32.mrf.mxu0
    %v725 = vadd.f32 %v560, %v724
    %v726 = vpop.f32.mrf.mxu0
    %727 = vmatprep.mubr.f32.mxu0 0.0
    %728 = vmatmul.mubr.f32.gmra.mxu0 %v566
    %v729 = vpop.f32.mrf.mxu0
    %v730 = vadd.f32 %v560, %v729
    %v731 = vpop.f32.mrf.mxu0
    %732 = vmatprep.mubr.f32.mxu0 0.0
    %733 = vmatmul.mubr.f32.gmra.mxu0 %v569
    %v734 = vpop.f32.mrf.mxu0
    %v735 = vadd.f32 %v560, %v734
    %v736 = vpop.f32.mrf.mxu0
    %737 = vmatprep.mubr.f32.mxu0 0.0
    %738 = vmatmul.mubr.f32.gmra.mxu0 %v572
    %v739 = vpop.f32.mrf.mxu0
    %v740 = vadd.f32 %v560, %v739
    %v741 = vpop.f32.mrf.mxu0
    %742 = vmatprep.mubr.f32.mxu0 0.0
    %743 = vmatmul.mubr.f32.gmra.mxu0 %v575
    %v744 = vpop.f32.mrf.mxu0
    %v745 = vadd.f32 %v560, %v744
    %v746 = vpop.f32.mrf.mxu0
    %747 = vmatprep.mubr.f32.mxu0 0.0
    %748 = vmatmul.mubr.f32.gmra.mxu0 %v578
    %v749 = vpop.f32.mrf.mxu0
    %v750 = vadd.f32 %v560, %v749
    %v751 = vpop.f32.mrf.mxu0
    %752 = vmatprep.mubr.f32.mxu0 0.0
    %753 = vmatmul.mubr.f32.gmra.mxu0 %v581
    %v754 = vpop.f32.mrf.mxu0
    %v755 = vadd.f32 %v560, %v754
    %v756 = vpop.f32.mrf.mxu0
    %757 = vmatprep.mubr.f32.mxu0 0.0
    %758 = vmatmul.mubr.f32.gmra.mxu0 %v584
    %v759 = vpop.f32.mrf.mxu0
    %v760 = vadd.f32 %v560, %v759
    %v761 = vpop.f32.mrf.mxu0
    %762 = vmatprep.mubr.f32.mxu0 0.0
    %763 = vmatmul.mubr.f32.gmra.mxu0 %v587
    %v764 = vpop.f32.mrf.mxu0
    %v765 = vadd.f32 %v560, %v764
    %v766 = vpop.f32.mrf.mxu0
    %767 = vmatprep.mubr.f32.mxu0 0.0
    %768 = vmatmul.mubr.f32.gmra.mxu0 %v590
    %v769 = vpop.f32.mrf.mxu0
    %v770 = vadd.f32 %v560, %v769
    %v771 = vpop.f32.mrf.mxu0
    %772 = vmatprep.mubr.f32.mxu0 0.0
    %773 = vmatmul.mubr.f32.gmra.mxu0 %v593
    %v774 = vpop.f32.mrf.mxu0
    %v775 = vadd.f32 %v560, %v774
    %v776 = vpop.f32.mrf.mxu0
    %777 = vmatprep.mubr.f32.mxu0 0.0
    %778 = vmatmul.mubr.f32.gmra.mxu0 %v596
    %v779 = vpop.f32.mrf.mxu0
    %v780 = vadd.f32 %v560, %v779
    %v781 = vpop.f32.mrf.mxu0
    %782 = vmatprep.mubr.f32.mxu0 0.0
    %783 = vmatmul.mubr.f32.gmra.mxu0 %v599
    %v784 = vpop.f32.mrf.mxu0
    %v785 = vadd.f32 %v560, %v784
    %v786 = vpop.f32.mrf.mxu0
    %787 = vmatprep.mubr.f32.mxu0 0.0
    %788 = vmatmul.mubr.f32.gmra.mxu0 %v602
    %v789 = vpop.f32.mrf.mxu0
    %v790 = vadd.f32 %v560, %v789
    %v791 = vpop.f32.mrf.mxu0
    %792 = vmatprep.mubr.f32.mxu0 0.0
    %793 = vmatmul.mubr.f32.gmra.mxu0 %v605
    %v794 = vpop.f32.mrf.mxu0
    %v795 = vadd.f32 %v560, %v794
    %v796 = vpop.f32.mrf.mxu0
    %797 = vmatprep.mubr.f32.mxu0 0.0
    %798 = vmatmul.mubr.f32.gmra.mxu0 %v608
    %v799 = vpop.f32.mrf.mxu0
    %v800 = vadd.f32 %v560, %v799
    %v801 = vpop.f32.mrf.mxu0
    %802 = vmatprep.mubr.f32.mxu0 0.0
    %803 = vmatmul.mubr.f32.gmra.mxu0 %v611
    %v804 = vpop.f32.mrf.mxu0
    %v805 = vadd.f32 %v560, %v804
    %v806 = vpop.f32.mrf.mxu0
    %807 = vmatprep.mubr.f32.mxu0 0.0
    %808 = vmatmul.mubr.f32.gmra.mxu0 %v614
    %v809 = vpop.f32.mrf.mxu0
    %v810 = vadd.f32 %v560, %v809
    %v811 = vpop.f32.mrf.mxu0
    %812 = vmatprep.mubr.f32.mxu0 0.0
    %813 = vmatmul.mubr.f32.gmra.mxu0 %v617
    %v814 = vpop.f32.mrf.mxu0
    %v815 = vadd.f32 %v560, %v814
    %v816 = vpop.f32.mrf.mxu0
    %817 = vmatprep.mubr.f32.mxu0 0.0
    %818 = vmatmul.mubr.f32.gmra.mxu0 %v620
    %v819 = vpop.f32.mrf.mxu0
    %v820 = vadd.f32 %v560, %v819
    %v821 = vpop.f32.mrf.mxu0
    %822 = vmatprep.mubr.f32.mxu0 0.0
    %823 = vmatmul.mubr.f32.gmra.mxu0 %v623
    %v824 = vpop.f32.mrf.mxu0
    %v825 = vadd.f32 %v560, %v824
    %v826 = vpop.f32.mrf.mxu0
    %827 = vmatprep.mubr.f32.mxu0 0.0
    %828 = vmatmul.mubr.f32.gmra.mxu0 %v626
    %v829 = vpop.f32.mrf.mxu0
    %v830 = vadd.f32 %v560, %v829
    %v831 = vpop.f32.mrf.mxu0
    %832 = vmatprep.mubr.f32.mxu0 0.0
    %833 = vmatmul.mubr.f32.gmra.mxu0 %v629
    %v834 = vpop.f32.mrf.mxu0
    %v835 = vadd.f32 %v560, %v834
    %v836 = vpop.f32.mrf.mxu0
    %837 = vmatprep.mubr.f32.mxu0 0.0
    %838 = vmatmul.mubr.f32.gmra.mxu0 %v632
    %v839 = vpop.f32.mrf.mxu0
    %v840 = vadd.f32 %v560, %v839
    %v841 = vpop.f32.mrf.mxu0
    %842 = vmatprep.mubr.f32.mxu0 0.0
    %843 = vmatmul.mubr.f32.gmra.mxu0 %v635
    %v844 = vpop.f32.mrf.mxu0
    %v845 = vadd.f32 %v560, %v844
    %v846 = vpop.f32.mrf.mxu0
    %847 = vmatprep.mubr.f32.mxu0 0.0
    %848 = vmatmul.mubr.f32.gmra.mxu0 %v638
    %v849 = vpop.f32.mrf.mxu0
    %v850 = vadd.f32 %v560, %v849
    %v851 = vpop.f32.mrf.mxu0
    %852 = vmatprep.mubr.f32.mxu0 0.0
    %853 = vmatmul.mubr.f32.gmra.mxu0 %v641
    %v854 = vpop.f32.mrf.mxu0
    %v855 = vadd.f32 %v560, %v854
    %v856 = vpop.f32.mrf.mxu0
    %857 = vmatprep.mubr.f32.mxu0 0.0
    %858 = vmatmul.mubr.f32.gmra.mxu0 %v644
    %v859 = vpop.f32.mrf.mxu0
    %v860 = vadd.f32 %v560, %v859
    %v861 = vpop.f32.mrf.mxu0
    %862 = vmatprep.mubr.f32.mxu0 0.0
    %863 = vmatmul.mubr.f32.gmra.mxu0 %v647
    %v864 = vpop.f32.mrf.mxu0
    %v865 = vadd.f32 %v560, %v864
    %v866 = vpop.f32.mrf.mxu0
    %867 = vmatprep.mubr.f32.mxu0 0.0
    %868 = vmatmul.mubr.f32.gmra.mxu0 %v650
    %v869 = vpop.f32.mrf.mxu0
    %v870 = vadd.f32 %v560, %v869
    %v871 = vpop.f32.mrf.mxu0
    %872 = vmatprep.mubr.f32.mxu0 0.0
    %873 = vmatmul.mubr.f32.gmra.mxu0 %v653
    %v874 = vpop.f32.mrf.mxu0
    %v875 = vadd.f32 %v560, %v874
    %v876 = vpop.f32.mrf.mxu0
    %877 = vmatprep.mubr.f32.mxu0 0.0
    %878 = vmatmul.mubr.f32.gmra.mxu0 %v656
    %v879 = vpop.f32.mrf.mxu0
    %v880 = vadd.f32 %v560, %v879
    %v881 = vpop.f32.mrf.mxu0
    %882 = vdwg.mxu0
    %v883 = vxor.u32 %v725, 2147483648
    %v884 = vxor.u32 %v730, 2147483648
    %v885 = vxor.u32 %v735, 2147483648
    %v886 = vxor.u32 %v740, 2147483648
    %v887 = vxor.u32 %v745, 2147483648
    %v888 = vxor.u32 %v750, 2147483648
    %v889 = vxor.u32 %v755, 2147483648
    %v890 = vxor.u32 %v760, 2147483648
    %v891 = vxor.u32 %v765, 2147483648
    %v892 = vxor.u32 %v770, 2147483648
    %v893 = vxor.u32 %v775, 2147483648
    %v894 = vxor.u32 %v780, 2147483648
    %v895 = vxor.u32 %v785, 2147483648
    %v896 = vxor.u32 %v790, 2147483648
    %v897 = vxor.u32 %v795, 2147483648
    %v898 = vxor.u32 %v800, 2147483648
    %v899 = vxor.u32 %v805, 2147483648
    %v900 = vxor.u32 %v810, 2147483648
    %v901 = vxor.u32 %v815, 2147483648
    %v902 = vxor.u32 %v820, 2147483648
    %v903 = vxor.u32 %v825, 2147483648
    %v904 = vxor.u32 %v830, 2147483648
    %v905 = vxor.u32 %v835, 2147483648
    %v906 = vxor.u32 %v840, 2147483648
    %v907 = vxor.u32 %v845, 2147483648
    %v908 = vxor.u32 %v850, 2147483648
    %v909 = vxor.u32 %v855, 2147483648
    %v910 = vxor.u32 %v860, 2147483648
    %v911 = vxor.u32 %v865, 2147483648
    %v912 = vxor.u32 %v870, 2147483648
    %v913 = vxor.u32 %v875, 2147483648
    %v914 = vxor.u32 %v880, 2147483648
    %v915 = vmul.f32 %v883, 1.442695
    %v916 = vpow.pop %v915
    %v917 = vmul.f32 %v884, 1.442695
    %v918 = vpow.pop %v917
    %v919 = vmul.f32 %v885, 1.442695
    %v920 = vpow.pop %v919
    %v921 = vmul.f32 %v886, 1.442695
    %v922 = vpow.pop %v921
    %v923 = vmul.f32 %v887, 1.442695
    %v924 = vpow.pop %v923
    %v925 = vmul.f32 %v888, 1.442695
    %v926 = vpow.pop %v925
    %v927 = vmul.f32 %v889, 1.442695
    %v928 = vpow.pop %v927
    %v929 = vmul.f32 %v890, 1.442695
    %v930 = vpow.pop %v929
    %v931 = vmul.f32 %v891, 1.442695
    %v932 = vpow.pop %v931
    %v933 = vmul.f32 %v892, 1.442695
    %v934 = vpow.pop %v933
    %v935 = vmul.f32 %v893, 1.442695
    %v936 = vpow.pop %v935
    %v937 = vmul.f32 %v894, 1.442695
    %v938 = vpow.pop %v937
    %v939 = vmul.f32 %v895, 1.442695
    %v940 = vpow.pop %v939
    %v941 = vmul.f32 %v896, 1.442695
    %v942 = vpow.pop %v941
    %v943 = vmul.f32 %v897, 1.442695
    %v944 = vpow.pop %v943
    %v945 = vmul.f32 %v898, 1.442695
    %v946 = vpow.pop %v945
    %v947 = vmul.f32 %v899, 1.442695
    %v948 = vpow.pop %v947
    %v949 = vmul.f32 %v900, 1.442695
    %v950 = vpow.pop %v949
    %v951 = vmul.f32 %v901, 1.442695
    %v952 = vpow.pop %v951
    %v953 = vmul.f32 %v902, 1.442695
    %v954 = vpow.pop %v953
    %v955 = vmul.f32 %v903, 1.442695
    %v956 = vpow.pop %v955
    %v957 = vmul.f32 %v904, 1.442695
    %v958 = vpow.pop %v957
    %v959 = vmul.f32 %v905, 1.442695
    %v960 = vpow.pop %v959
    %v961 = vmul.f32 %v906, 1.442695
    %v962 = vpow.pop %v961
    %v963 = vmul.f32 %v907, 1.442695
    %v964 = vpow.pop %v963
    %v965 = vmul.f32 %v908, 1.442695
    %v966 = vpow.pop %v965
    %v967 = vmul.f32 %v909, 1.442695
    %v968 = vpow.pop %v967
    %v969 = vmul.f32 %v910, 1.442695
    %v970 = vpow.pop %v969
    %v971 = vmul.f32 %v911, 1.442695
    %v972 = vpow.pop %v971
    %v973 = vmul.f32 %v912, 1.442695
    %v974 = vpow.pop %v973
    %v975 = vmul.f32 %v913, 1.442695
    %v976 = vpow.pop %v975
    %v977 = vmul.f32 %v914, 1.442695
    %v978 = vpow.pop %v977
    %v979 = vadd.f32 %v916, 1.0
    %v980 = vadd.f32 %v918, 1.0
    %v981 = vadd.f32 %v920, 1.0
    %v982 = vadd.f32 %v922, 1.0
    %v983 = vadd.f32 %v924, 1.0
    %v984 = vadd.f32 %v926, 1.0
    %v985 = vadd.f32 %v928, 1.0
    %v986 = vadd.f32 %v930, 1.0
    %v987 = vadd.f32 %v932, 1.0
    %v988 = vadd.f32 %v934, 1.0
    %v989 = vadd.f32 %v936, 1.0
    %v990 = vadd.f32 %v938, 1.0
    %v991 = vadd.f32 %v940, 1.0
    %v992 = vadd.f32 %v942, 1.0
    %v993 = vadd.f32 %v944, 1.0
    %v994 = vadd.f32 %v946, 1.0
    %v995 = vadd.f32 %v948, 1.0
    %v996 = vadd.f32 %v950, 1.0
    %v997 = vadd.f32 %v952, 1.0
    %v998 = vadd.f32 %v954, 1.0
    %v999 = vadd.f32 %v956, 1.0
    %v1000 = vadd.f32 %v958, 1.0
    %v1001 = vadd.f32 %v960, 1.0
    %v1002 = vadd.f32 %v962, 1.0
    %v1003 = vadd.f32 %v964, 1.0
    %v1004 = vadd.f32 %v966, 1.0
    %v1005 = vadd.f32 %v968, 1.0
    %v1006 = vadd.f32 %v970, 1.0
    %v1007 = vadd.f32 %v972, 1.0
    %v1008 = vadd.f32 %v974, 1.0
    %v1009 = vadd.f32 %v976, 1.0
    %v1010 = vadd.f32 %v978, 1.0
    %v1011 = vrcp.pop %v979
    %v1012 = vmul.f32 1.0, %v1011
    %v1013 = vrcp.pop %v980
    %v1014 = vmul.f32 1.0, %v1013
    %v1015 = vrcp.pop %v981
    %v1016 = vmul.f32 1.0, %v1015
    %v1017 = vrcp.pop %v982
    %v1018 = vmul.f32 1.0, %v1017
    %v1019 = vrcp.pop %v983
    %v1020 = vmul.f32 1.0, %v1019
    %v1021 = vrcp.pop %v984
    %v1022 = vmul.f32 1.0, %v1021
    %v1023 = vrcp.pop %v985
    %v1024 = vmul.f32 1.0, %v1023
    %v1025 = vrcp.pop %v986
    %v1026 = vmul.f32 1.0, %v1025
    %v1027 = vrcp.pop %v987
    %v1028 = vmul.f32 1.0, %v1027
    %v1029 = vrcp.pop %v988
    %v1030 = vmul.f32 1.0, %v1029
    %v1031 = vrcp.pop %v989
    %v1032 = vmul.f32 1.0, %v1031
    %v1033 = vrcp.pop %v990
    %v1034 = vmul.f32 1.0, %v1033
    %v1035 = vrcp.pop %v991
    %v1036 = vmul.f32 1.0, %v1035
    %v1037 = vrcp.pop %v992
    %v1038 = vmul.f32 1.0, %v1037
    %v1039 = vrcp.pop %v993
    %v1040 = vmul.f32 1.0, %v1039
    %v1041 = vrcp.pop %v994
    %v1042 = vmul.f32 1.0, %v1041
    %v1043 = vrcp.pop %v995
    %v1044 = vmul.f32 1.0, %v1043
    %v1045 = vrcp.pop %v996
    %v1046 = vmul.f32 1.0, %v1045
    %v1047 = vrcp.pop %v997
    %v1048 = vmul.f32 1.0, %v1047
    %v1049 = vrcp.pop %v998
    %v1050 = vmul.f32 1.0, %v1049
    %v1051 = vrcp.pop %v999
    %v1052 = vmul.f32 1.0, %v1051
    %v1053 = vrcp.pop %v1000
    %v1054 = vmul.f32 1.0, %v1053
    %v1055 = vrcp.pop %v1001
    %v1056 = vmul.f32 1.0, %v1055
    %v1057 = vrcp.pop %v1002
    %v1058 = vmul.f32 1.0, %v1057
    %v1059 = vrcp.pop %v1003
    %v1060 = vmul.f32 1.0, %v1059
    %v1061 = vrcp.pop %v1004
    %v1062 = vmul.f32 1.0, %v1061
    %v1063 = vrcp.pop %v1005
    %v1064 = vmul.f32 1.0, %v1063
    %v1065 = vrcp.pop %v1006
    %v1066 = vmul.f32 1.0, %v1065
    %v1067 = vrcp.pop %v1007
    %v1068 = vmul.f32 1.0, %v1067
    %v1069 = vrcp.pop %v1008
    %v1070 = vmul.f32 1.0, %v1069
    %v1071 = vrcp.pop %v1009
    %v1072 = vmul.f32 1.0, %v1071
    %v1073 = vrcp.pop %v1010
    %v1074 = vmul.f32 1.0, %v1073
    %1107 = vrot.lane.b32.xlu0 %v1012, 112
    %v1108 = vpop.permute.xlu0 %1107
    %1109 = vrot.lane.b32.xlu0 %v1014, 112
    %v1110 = vpop.permute.xlu0 %1109
    %1111 = vrot.lane.b32.xlu0 %v1016, 112
    %v1112 = vpop.permute.xlu0 %1111
    %1113 = vrot.lane.b32.xlu0 %v1018, 112
    %v1114 = vpop.permute.xlu0 %1113
    %1115 = vrot.lane.b32.xlu0 %v1020, 112
    %v1116 = vpop.permute.xlu0 %1115
    %1117 = vrot.lane.b32.xlu0 %v1022, 112
    %v1118 = vpop.permute.xlu0 %1117
    %1119 = vrot.lane.b32.xlu0 %v1024, 112
    %v1120 = vpop.permute.xlu0 %1119
    %1121 = vrot.lane.b32.xlu0 %v1026, 112
    %v1122 = vpop.permute.xlu0 %1121
    %1123 = vrot.lane.b32.xlu0 %v1028, 112
    %v1124 = vpop.permute.xlu0 %1123
    %1125 = vrot.lane.b32.xlu0 %v1030, 112
    %v1126 = vpop.permute.xlu0 %1125
    %1127 = vrot.lane.b32.xlu0 %v1032, 112
    %v1128 = vpop.permute.xlu0 %1127
    %1129 = vrot.lane.b32.xlu0 %v1034, 112
    %v1130 = vpop.permute.xlu0 %1129
    %1131 = vrot.lane.b32.xlu0 %v1036, 112
    %v1132 = vpop.permute.xlu0 %1131
    %1133 = vrot.lane.b32.xlu0 %v1038, 112
    %v1134 = vpop.permute.xlu0 %1133
    %1135 = vrot.lane.b32.xlu0 %v1040, 112
    %v1136 = vpop.permute.xlu0 %1135
    %1137 = vrot.lane.b32.xlu0 %v1042, 112
    %v1138 = vpop.permute.xlu0 %1137
    %1139 = vrot.lane.b32.xlu0 %v1044, 112
    %v1140 = vpop.permute.xlu0 %1139
    %1141 = vrot.lane.b32.xlu0 %v1046, 112
    %v1142 = vpop.permute.xlu0 %1141
    %1143 = vrot.lane.b32.xlu0 %v1048, 112
    %v1144 = vpop.permute.xlu0 %1143
    %1145 = vrot.lane.b32.xlu0 %v1050, 112
    %v1146 = vpop.permute.xlu0 %1145
    %1147 = vrot.lane.b32.xlu0 %v1052, 112
    %v1148 = vpop.permute.xlu0 %1147
    %1149 = vrot.lane.b32.xlu0 %v1054, 112
    %v1150 = vpop.permute.xlu0 %1149
    %1151 = vrot.lane.b32.xlu0 %v1056, 112
    %v1152 = vpop.permute.xlu0 %1151
    %1153 = vrot.lane.b32.xlu0 %v1058, 112
    %v1154 = vpop.permute.xlu0 %1153
    %1155 = vrot.lane.b32.xlu0 %v1060, 112
    %v1156 = vpop.permute.xlu0 %1155
    %1157 = vrot.lane.b32.xlu0 %v1062, 112
    %v1158 = vpop.permute.xlu0 %1157
    %1159 = vrot.lane.b32.xlu0 %v1064, 112
    %v1160 = vpop.permute.xlu0 %1159
    %1161 = vrot.lane.b32.xlu0 %v1066, 112
    %v1162 = vpop.permute.xlu0 %1161
    %1163 = vrot.lane.b32.xlu0 %v1068, 112
    %v1164 = vpop.permute.xlu0 %1163
    %1165 = vrot.lane.b32.xlu0 %v1070, 112
    %v1166 = vpop.permute.xlu0 %1165
    %1167 = vrot.lane.b32.xlu0 %v1072, 112
    %v1168 = vpop.permute.xlu0 %1167
    %1169 = vrot.lane.b32.xlu0 %v1074, 112
    %v1170 = vpop.permute.xlu0 %1169
    %v1203 = vmul.f32 %v725, %v1108
    %v1204 = vmul.f32 %v730, %v1110
    %v1205 = vmul.f32 %v735, %v1112
    %v1206 = vmul.f32 %v740, %v1114
    %v1207 = vmul.f32 %v745, %v1116
    %v1208 = vmul.f32 %v750, %v1118
    %v1209 = vmul.f32 %v755, %v1120
    %v1210 = vmul.f32 %v760, %v1122
    %v1211 = vmul.f32 %v765, %v1124
    %v1212 = vmul.f32 %v770, %v1126
    %v1213 = vmul.f32 %v775, %v1128
    %v1214 = vmul.f32 %v780, %v1130
    %v1215 = vmul.f32 %v785, %v1132
    %v1216 = vmul.f32 %v790, %v1134
    %v1217 = vmul.f32 %v795, %v1136
    %v1218 = vmul.f32 %v800, %v1138
    %v1219 = vmul.f32 %v805, %v1140
    %v1220 = vmul.f32 %v810, %v1142
    %v1221 = vmul.f32 %v815, %v1144
    %v1222 = vmul.f32 %v820, %v1146
    %v1223 = vmul.f32 %v825, %v1148
    %v1224 = vmul.f32 %v830, %v1150
    %v1225 = vmul.f32 %v835, %v1152
    %v1226 = vmul.f32 %v840, %v1154
    %v1227 = vmul.f32 %v845, %v1156
    %v1228 = vmul.f32 %v850, %v1158
    %v1229 = vmul.f32 %v855, %v1160
    %v1230 = vmul.f32 %v860, %v1162
    %v1231 = vmul.f32 %v865, %v1164
    %v1232 = vmul.f32 %v870, %v1166
    %v1233 = vmul.f32 %v875, %v1168
    %v1234 = vmul.f32 %v880, %v1170
    %1235 = vxpose.xlu0.b32.start [1/16] %v1203, 128
    %1236 = vxpose.xlu0.b32.cont [2/16] %v1204, 128
    %1237 = vxpose.xlu0.b32.cont [3/16] %v1205, 128
    %1238 = vxpose.xlu0.b32.cont [4/16] %v1206, 128
    %1239 = vxpose.xlu0.b32.cont [5/16] %v1207, 128
    %1240 = vxpose.xlu0.b32.cont [6/16] %v1208, 128
    %1241 = vxpose.xlu0.b32.cont [7/16] %v1209, 128
    %1242 = vxpose.xlu0.b32.cont [8/16] %v1210, 128
    %1243 = vxpose.xlu0.b32.cont [9/16] %v1211, 128
    %1244 = vxpose.xlu0.b32.cont [10/16] %v1212, 128
    %1245 = vxpose.xlu0.b32.cont [11/16] %v1213, 128
    %1246 = vxpose.xlu0.b32.cont [12/16] %v1214, 128
    %1247 = vxpose.xlu0.b32.cont [13/16] %v1215, 128
    %1248 = vxpose.xlu0.b32.cont [14/16] %v1216, 128
    %1249 = vxpose.xlu0.b32.cont [15/16] %v1217, 128
    %1250 = vxpose.xlu0.b32.end [16/16] %v1218, 128
    %v1251 = vpop.trf.xlu0
    %v1252 = vpop.trf.xlu0
    %v1253 = vpop.trf.xlu0
    %v1254 = vpop.trf.xlu0
    %v1255 = vpop.trf.xlu0
    %v1256 = vpop.trf.xlu0
    %v1257 = vpop.trf.xlu0
    %v1258 = vpop.trf.xlu0
    %v1259 = vpop.trf.xlu0
    %v1260 = vpop.trf.xlu0
    %v1261 = vpop.trf.xlu0
    %v1262 = vpop.trf.xlu0
    %v1263 = vpop.trf.xlu0
    %v1264 = vpop.trf.xlu0
    %v1265 = vpop.trf.xlu0
    %v1266 = vpop.trf.xlu0
    %1267 = vxpose.xlu0.b32.start [1/16] %v1219, 128
    %1268 = vxpose.xlu0.b32.cont [2/16] %v1220, 128
    %1269 = vxpose.xlu0.b32.cont [3/16] %v1221, 128
    %1270 = vxpose.xlu0.b32.cont [4/16] %v1222, 128
    %1271 = vxpose.xlu0.b32.cont [5/16] %v1223, 128
    %1272 = vxpose.xlu0.b32.cont [6/16] %v1224, 128
    %1273 = vxpose.xlu0.b32.cont [7/16] %v1225, 128
    %1274 = vxpose.xlu0.b32.cont [8/16] %v1226, 128
    %1275 = vxpose.xlu0.b32.cont [9/16] %v1227, 128
    %1276 = vxpose.xlu0.b32.cont [10/16] %v1228, 128
    %1277 = vxpose.xlu0.b32.cont [11/16] %v1229, 128
    %1278 = vxpose.xlu0.b32.cont [12/16] %v1230, 128
    %1279 = vxpose.xlu0.b32.cont [13/16] %v1231, 128
    %1280 = vxpose.xlu0.b32.cont [14/16] %v1232, 128
    %1281 = vxpose.xlu0.b32.cont [15/16] %v1233, 128
    %1282 = vxpose.xlu0.b32.end [16/16] %v1234, 128
    %v1283 = vpop.trf.xlu0
    %v1284 = vpop.trf.xlu0
    %v1285 = vpop.trf.xlu0
    %v1286 = vpop.trf.xlu0
    %v1287 = vpop.trf.xlu0
    %v1288 = vpop.trf.xlu0
    %v1289 = vpop.trf.xlu0
    %v1290 = vpop.trf.xlu0
    %v1291 = vpop.trf.xlu0
    %v1292 = vpop.trf.xlu0
    %v1293 = vpop.trf.xlu0
    %v1294 = vpop.trf.xlu0
    %v1295 = vpop.trf.xlu0
    %v1296 = vpop.trf.xlu0
    %v1297 = vpop.trf.xlu0
    %v1298 = vpop.trf.xlu0
    %v1299 = vpack.c.bf16 %v1252, %v1251
    %v1300 = vpack.c.bf16 %v1284, %v1283
    %v1303 = vunpack.c.l.b16 %v1299
    %v1304 = vunpack.c.l.b16 %v1300
    %v1305 = vunpack.c.h.b16 %v1299
    %v1306 = vunpack.c.h.b16 %v1300
    %v1307 = vpack.c.b16 %v1304, %v1303
    %v1308 = vpack.c.b16 %v1306, %v1305
    %1311 = vst [vmem:[#allocation2] sm:$0xff] %v1307
    %1312 = vst [vmem:[#allocation2 + $0x8] sm:$0xff] %v1308
    %v1313 = vpack.c.bf16 %v1014, %v1012
    %v1314 = vpack.c.bf16 %v1018, %v1016
    %v1315 = vpack.c.bf16 %v1022, %v1020
    %v1316 = vpack.c.bf16 %v1026, %v1024
    %v1317 = vpack.c.bf16 %v1030, %v1028
    %v1318 = vpack.c.bf16 %v1034, %v1032
    %v1319 = vpack.c.bf16 %v1038, %v1036
    %v1320 = vpack.c.bf16 %v1042, %v1040
    %v1321 = vpack.c.bf16 %v1046, %v1044
    %v1322 = vpack.c.bf16 %v1050, %v1048
    %v1323 = vpack.c.bf16 %v1054, %v1052
    %v1324 = vpack.c.bf16 %v1058, %v1056
    %v1325 = vpack.c.bf16 %v1062, %v1060
    %v1326 = vpack.c.bf16 %v1066, %v1064
    %v1327 = vpack.c.bf16 %v1070, %v1068
    %v1328 = vpack.c.bf16 %v1074, %v1072
    %v1345 = vunpack.c.l.b16 %v1313
    %v1346 = vunpack.c.h.b16 %v1313
    %v1347 = vunpack.c.l.b16 %v1314
    %v1348 = vunpack.c.h.b16 %v1314
    %v1349 = vunpack.c.l.b16 %v1315
    %v1350 = vunpack.c.h.b16 %v1315
    %v1351 = vunpack.c.l.b16 %v1316
    %v1352 = vunpack.c.h.b16 %v1316
    %v1353 = vunpack.c.l.b16 %v1317
    %v1354 = vunpack.c.h.b16 %v1317
    %v1355 = vunpack.c.l.b16 %v1318
    %v1356 = vunpack.c.h.b16 %v1318
    %v1357 = vunpack.c.l.b16 %v1319
    %v1358 = vunpack.c.h.b16 %v1319
    %v1359 = vunpack.c.l.b16 %v1320
    %v1360 = vunpack.c.h.b16 %v1320
    %v1361 = vunpack.c.l.b16 %v1321
    %v1362 = vunpack.c.h.b16 %v1321
    %v1363 = vunpack.c.l.b16 %v1322
    %v1364 = vunpack.c.h.b16 %v1322
    %v1365 = vunpack.c.l.b16 %v1323
    %v1366 = vunpack.c.h.b16 %v1323
    %v1367 = vunpack.c.l.b16 %v1324
    %v1368 = vunpack.c.h.b16 %v1324
    %v1369 = vunpack.c.l.b16 %v1325
    %v1370 = vunpack.c.h.b16 %v1325
    %v1371 = vunpack.c.l.b16 %v1326
    %v1372 = vunpack.c.h.b16 %v1326
    %v1373 = vunpack.c.l.b16 %v1327
    %v1374 = vunpack.c.h.b16 %v1327
    %v1375 = vunpack.c.l.b16 %v1328
    %v1376 = vunpack.c.h.b16 %v1328
    %v1377 = vpack.c.b16 %v1345, %v1345
    %v1378 = vpack.c.b16 %v1346, %v1346
    %v1379 = vpack.c.b16 %v1347, %v1347
    %v1380 = vpack.c.b16 %v1348, %v1348
    %v1381 = vpack.c.b16 %v1349, %v1349
    %v1382 = vpack.c.b16 %v1350, %v1350
    %v1383 = vpack.c.b16 %v1351, %v1351
    %v1384 = vpack.c.b16 %v1352, %v1352
    %v1385 = vpack.c.b16 %v1353, %v1353
    %v1386 = vpack.c.b16 %v1354, %v1354
    %v1387 = vpack.c.b16 %v1355, %v1355
    %v1388 = vpack.c.b16 %v1356, %v1356
    %v1389 = vpack.c.b16 %v1357, %v1357
    %v1390 = vpack.c.b16 %v1358, %v1358
    %v1391 = vpack.c.b16 %v1359, %v1359
    %v1392 = vpack.c.b16 %v1360, %v1360
    %v1393 = vpack.c.b16 %v1361, %v1361
    %v1394 = vpack.c.b16 %v1362, %v1362
    %v1395 = vpack.c.b16 %v1363, %v1363
    %v1396 = vpack.c.b16 %v1364, %v1364
    %v1397 = vpack.c.b16 %v1365, %v1365
    %v1398 = vpack.c.b16 %v1366, %v1366
    %v1399 = vpack.c.b16 %v1367, %v1367
    %v1400 = vpack.c.b16 %v1368, %v1368
    %v1401 = vpack.c.b16 %v1369, %v1369
    %v1402 = vpack.c.b16 %v1370, %v1370
    %v1403 = vpack.c.b16 %v1371, %v1371
    %v1404 = vpack.c.b16 %v1372, %v1372
    %v1405 = vpack.c.b16 %v1373, %v1373
    %v1406 = vpack.c.b16 %v1374, %v1374
    %v1407 = vpack.c.b16 %v1375, %v1375
    %v1408 = vpack.c.b16 %v1376, %v1376
    %1409 = vrot.lane.b32.xlu0 %v1377, 96
    %v1410 = vpop.permute.xlu0 %1409
    %1411 = vrot.lane.b32.xlu0 %v1378, 96
    %v1412 = vpop.permute.xlu0 %1411
    %1413 = vrot.lane.b32.xlu0 %v1379, 96
    %v1414 = vpop.permute.xlu0 %1413
    %1415 = vrot.lane.b32.xlu0 %v1380, 96
    %v1416 = vpop.permute.xlu0 %1415
    %1417 = vrot.lane.b32.xlu0 %v1381, 96
    %v1418 = vpop.permute.xlu0 %1417
    %1419 = vrot.lane.b32.xlu0 %v1382, 96
    %v1420 = vpop.permute.xlu0 %1419
    %1421 = vrot.lane.b32.xlu0 %v1383, 96
    %v1422 = vpop.permute.xlu0 %1421
    %1423 = vrot.lane.b32.xlu0 %v1384, 96
    %v1424 = vpop.permute.xlu0 %1423
    %1425 = vrot.lane.b32.xlu0 %v1385, 96
    %v1426 = vpop.permute.xlu0 %1425
    %1427 = vrot.lane.b32.xlu0 %v1386, 96
    %v1428 = vpop.permute.xlu0 %1427
    %1429 = vrot.lane.b32.xlu0 %v1387, 96
    %v1430 = vpop.permute.xlu0 %1429
    %1431 = vrot.lane.b32.xlu0 %v1388, 96
    %v1432 = vpop.permute.xlu0 %1431
    %1433 = vrot.lane.b32.xlu0 %v1389, 96
    %v1434 = vpop.permute.xlu0 %1433
    %1435 = vrot.lane.b32.xlu0 %v1390, 96
    %v1436 = vpop.permute.xlu0 %1435
    %1437 = vrot.lane.b32.xlu0 %v1391, 96
    %v1438 = vpop.permute.xlu0 %1437
    %1439 = vrot.lane.b32.xlu0 %v1392, 96
    %v1440 = vpop.permute.xlu0 %1439
    %1441 = vrot.lane.b32.xlu0 %v1393, 96
    %v1442 = vpop.permute.xlu0 %1441
    %1443 = vrot.lane.b32.xlu0 %v1394, 96
    %v1444 = vpop.permute.xlu0 %1443
    %1445 = vrot.lane.b32.xlu0 %v1395, 96
    %v1446 = vpop.permute.xlu0 %1445
    %1447 = vrot.lane.b32.xlu0 %v1396, 96
    %v1448 = vpop.permute.xlu0 %1447
    %1449 = vrot.lane.b32.xlu0 %v1397, 96
    %v1450 = vpop.permute.xlu0 %1449
    %1451 = vrot.lane.b32.xlu0 %v1398, 96
    %v1452 = vpop.permute.xlu0 %1451
    %1453 = vrot.lane.b32.xlu0 %v1399, 96
    %v1454 = vpop.permute.xlu0 %1453
    %1455 = vrot.lane.b32.xlu0 %v1400, 96
    %v1456 = vpop.permute.xlu0 %1455
    %1457 = vrot.lane.b32.xlu0 %v1401, 96
    %v1458 = vpop.permute.xlu0 %1457
    %1459 = vrot.lane.b32.xlu0 %v1402, 96
    %v1460 = vpop.permute.xlu0 %1459
    %1461 = vrot.lane.b32.xlu0 %v1403, 96
    %v1462 = vpop.permute.xlu0 %1461
    %1463 = vrot.lane.b32.xlu0 %v1404, 96
    %v1464 = vpop.permute.xlu0 %1463
    %1465 = vrot.lane.b32.xlu0 %v1405, 96
    %v1466 = vpop.permute.xlu0 %1465
    %1467 = vrot.lane.b32.xlu0 %v1406, 96
    %v1468 = vpop.permute.xlu0 %1467
    %1469 = vrot.lane.b32.xlu0 %v1407, 96
    %v1470 = vpop.permute.xlu0 %1469
    %1471 = vrot.lane.b32.xlu0 %v1408, 96
    %v1472 = vpop.permute.xlu0 %1471
    %vm1505 = vcmask 257024
    %1506 = vst.msk [vmem:[%s6] sm:$0xf] %vm1505, %v1410
    %1507 = vst.msk [vmem:[%s6 + $0x4] sm:$0xf] %vm1505, %v1412
    %1508 = vst.msk [vmem:[%s6 + $0x8] sm:$0xf] %vm1505, %v1414
    %1509 = vst.msk [vmem:[%s6 + $0xc] sm:$0xf] %vm1505, %v1416
    %1510 = vst.msk [vmem:[%s6 + $0x10] sm:$0xf] %vm1505, %v1418
    %1511 = vst.msk [vmem:[%s6 + $0x14] sm:$0xf] %vm1505, %v1420
    %1512 = vst.msk [vmem:[%s6 + $0x18] sm:$0xf] %vm1505, %v1422
    %1513 = vst.msk [vmem:[%s6 + $0x1c] sm:$0xf] %vm1505, %v1424
    %1514 = vst.msk [vmem:[%s6 + $0x20] sm:$0xf] %vm1505, %v1426
    %1515 = vst.msk [vmem:[%s6 + $0x24] sm:$0xf] %vm1505, %v1428
    %1516 = vst.msk [vmem:[%s6 + $0x28] sm:$0xf] %vm1505, %v1430
    %1517 = vst.msk [vmem:[%s6 + $0x2c] sm:$0xf] %vm1505, %v1432
    %1518 = vst.msk [vmem:[%s6 + $0x30] sm:$0xf] %vm1505, %v1434
    %1519 = vst.msk [vmem:[%s6 + $0x34] sm:$0xf] %vm1505, %v1436
    %1520 = vst.msk [vmem:[%s6 + $0x38] sm:$0xf] %vm1505, %v1438
    %1521 = vst.msk [vmem:[%s6 + $0x3c] sm:$0xf] %vm1505, %v1440
    %1522 = vst.msk [vmem:[%s6 + $0x40] sm:$0xf] %vm1505, %v1442
    %1523 = vst.msk [vmem:[%s6 + $0x44] sm:$0xf] %vm1505, %v1444
    %1524 = vst.msk [vmem:[%s6 + $0x48] sm:$0xf] %vm1505, %v1446
    %1525 = vst.msk [vmem:[%s6 + $0x4c] sm:$0xf] %vm1505, %v1448
    %1526 = vst.msk [vmem:[%s6 + $0x50] sm:$0xf] %vm1505, %v1450
    %1527 = vst.msk [vmem:[%s6 + $0x54] sm:$0xf] %vm1505, %v1452
    %1528 = vst.msk [vmem:[%s6 + $0x58] sm:$0xf] %vm1505, %v1454
    %1529 = vst.msk [vmem:[%s6 + $0x5c] sm:$0xf] %vm1505, %v1456
    %1530 = vst.msk [vmem:[%s6 + $0x60] sm:$0xf] %vm1505, %v1458
    %1531 = vst.msk [vmem:[%s6 + $0x64] sm:$0xf] %vm1505, %v1460
    %1532 = vst.msk [vmem:[%s6 + $0x68] sm:$0xf] %vm1505, %v1462
    %1533 = vst.msk [vmem:[%s6 + $0x6c] sm:$0xf] %vm1505, %v1464
    %1534 = vst.msk [vmem:[%s6 + $0x70] sm:$0xf] %vm1505, %v1466
    %1535 = vst.msk [vmem:[%s6 + $0x74] sm:$0xf] %vm1505, %v1468
    %1536 = vst.msk [vmem:[%s6 + $0x78] sm:$0xf] %vm1505, %v1470
    %1537 = vst.msk [vmem:[%s6 + $0x7c] sm:$0xf] %vm1505, %v1472
    // Predicated region
    $region22: #{tpu_custom_call.1} parent=1 // pred_check
      _
    $region23: #{tpu_custom_call.1} parent=1 // pred_check_branch
      %1539 = sbr.rel (0) target = $region25
    $region24: #{tpu_custom_call.1} parent=1 // pred_region
      %s1541 = ssub.s32 256, 256
      %1542 = vsyncadd [#allocation3], %s1541
      %s1543 = sshll.u32 [#allocation2], 4
      %s1544 = int_to_ptr.vmem [resolvable:$true] %s1543
      %1549 = dma.vmem_to_hbm [thread:$0]  %s1544, 256, %s5, [#allocation3], 128, 128, 8
    $region25: #{tpu_custom_call.1} parent=1 // pred_fallthru
      _
    // Predicated region
    $region26: #{tpu_custom_call.1} parent=1 // pred_check
      _
    $region27: #{tpu_custom_call.1} parent=1 // pred_check_branch
      %1551 = sbr.rel (0) target = $region29
    $region28: #{tpu_custom_call.1} parent=1 // pred_region
      _
    $region29: #{tpu_custom_call.1} parent=1 // pred_fallthru
      _
    // Predicated region
    $region30: #{tpu_custom_call.1} parent=1 // pred_check
      _
    $region31: #{tpu_custom_call.1} parent=1 // pred_check_branch
      %1553 = sbr.rel (0) target = $region33
    $region32: #{tpu_custom_call.1} parent=1 // pred_region
      %1554 = dma.done [#allocation3], 256
    $region33: #{tpu_custom_call.1} parent=1 // pred_fallthru
      _
    // Predicated region
    $region34: #{tpu_custom_call.1} parent=1 // pred_check
      _
    $region35: #{tpu_custom_call.1} parent=1 // pred_check_branch
      %1556 = sbr.rel (0) target = $region37
    $region36: #{tpu_custom_call.1} parent=1 // pred_region
      _
    $region37: #{tpu_custom_call.1} parent=1 // pred_fallthru
      _
    %1557 = vsyncpa [#allocation3], 1

</llo_original>
